<compile_context>
chip_gen: v7x
topology: tpu7x:2x2x1
jax: 0.10.0
libtpu: 0.0.40
codegen_flags: <defaults>
</compile_context>

<pallas_src>
import jax
import jax.numpy as jnp
from jax.experimental import pallas as pl
from jax.experimental.pallas import tpu as pltpu  # noqa: F401  (no pltpu-specific features needed in this grid-less kernel)

# ----------------------- small, consistent hyper-params ----------------------
B = 2            # batch
L = 19           # sequence length (encoder bottleneck length becomes 1)
D = 16           # word_vec_size
V = 50           # vocab size
H0, H1, H2 = 8, 16, 12       # hidden_size
W0, W1_, W2_ = 3, 3, 4       # window_size
S0, S1, S2 = 2, 2, 1         # stride_size

L1 = (L - W0) // S0 + 1      # seq length after en_layer1 = 9
L2 = (L1 - W1_) // S1 + 1    # seq length after en_layer2 = 4
L3 = (L2 - W2_) // S2 + 1    # bottleneck length          = 1
assert L3 == 1
assert (1 - 1) * S2 + W2_ == L2
assert (L2 - 1) * S1 + W1_ == L1
assert (L1 - 1) * S0 + W0 == L

LANES = 128                  # lane-dense output width (V padded to 128)
assert V <= LANES and W2_ * H1 <= LANES and W0 * D <= LANES

# ---------------------- packed-weight layout (rows x 128 lanes) ---------------
R_W1   = 0                      # (W0*D, H0)   encoder layer 1
R_W2   = R_W1 + W0 * D          # (W1_*H0, H1) encoder layer 2
R_W3   = R_W2 + W1_ * H0        # (W2_*H1, H2) fclayer
R_WD3  = R_W3 + W2_ * H1        # (H2, W2_*H1) de_fclayer
R_WD2  = R_WD3 + H2             # (H1, W1_*H0) de_layer2
R_WD1  = R_WD2 + H1             # (H0, W0*D)   de_layer1
R_ET   = R_WD1 + H0             # (D, 128)     E^T (zero padded past V)
R_BIAS = R_ET + D               # one row holding all biases
RPACK  = R_BIAS + 1

B1_OFF, B2_OFF, B3_OFF = 0, H0, H0 + H1
BD3_OFF = B3_OFF + H2
BD2_OFF = BD3_OFF + 1
BD1_OFF = BD2_OFF + 1


# ------------------------- in-register layout helpers -------------------------
def _im2col(x, w, s, lout):
    """x: (lin, c) register value -> (lout, w*c) using static slices/concats."""
    rows = [jnp.concatenate([x[t * s + i:t * s + i + 1, :] for i in range(w)], axis=1)
            for t in range(lout)]
    return rows[0] if lout == 1 else jnp.concatenate(rows, axis=0)


def _col2im(z, w, s, lout, cout):
    """Transposed-conv scatter of z: (lin, w*cout) -> (lout, cout), registers only."""
    lin = z.shape[0]
    rows = []
    for t in range(lout):
        acc = None
        for i in range(w):
            p, r = divmod(t - i, s)
            if r == 0 and 0 <= p < lin:
                term = z[p:p + 1, i * cout:(i + 1) * cout]
                acc = term if acc is None else acc + term
        rows.append(acc)            # every output row has >= 1 contribution here
    return jnp.concatenate(rows, axis=0)


# --------------------------------- kernel ------------------------------------
def _tdae_kernel(x_ref, wp_ref, out_ref):
    f32 = jnp.float32

    def dotf(a, bm):
        return jnp.dot(a, bm, preferred_element_type=f32)

    # ---- unpack weights: static rectangular loads from the packed VMEM ref ----
    w1  = wp_ref[pl.ds(R_W1, W0 * D), pl.ds(0, H0)]        # (48, 8)
    w2  = wp_ref[pl.ds(R_W2, W1_ * H0), pl.ds(0, H1)]      # (24, 16)
    w3  = wp_ref[pl.ds(R_W3, W2_ * H1), pl.ds(0, H2)]      # (64, 12)
    wd3 = wp_ref[pl.ds(R_WD3, H2), pl.ds(0, W2_ * H1)]     # (12, 64)
    wd2 = wp_ref[pl.ds(R_WD2, H1), pl.ds(0, W1_ * H0)]     # (16, 24)
    wd1 = wp_ref[pl.ds(R_WD1, H0), pl.ds(0, W0 * D)]       # (8, 48)
    et  = wp_ref[pl.ds(R_ET, D), :]                        # (16, 128)
    brow = wp_ref[pl.ds(R_BIAS, 1), :]                     # (1, 128)
    b1v  = brow[:, B1_OFF:B1_OFF + H0]
    b2v  = brow[:, B2_OFF:B2_OFF + H1]
    b3v  = brow[:, B3_OFF:B3_OFF + H2]
    bd3v = brow[:, BD3_OFF:BD3_OFF + 1]
    bd2v = brow[:, BD2_OFF:BD2_OFF + 1]
    bd1v = brow[:, BD1_OFF:BD1_OFF + 1]

    # ---- encoder layer 1: strided-window im2col straight off the input ref ----
    # rows are batch-major: [b0 t0..t8 | b1 t0..t8]
    im1 = jnp.concatenate(
        [jnp.concatenate([x_ref[pl.ds(b * L + i, L1, S0), :] for i in range(W0)], axis=1)
         for b in range(B)], axis=0)                               # (B*L1, W0*D)
    h1 = dotf(im1, w1) + b1v                                       # (B*L1, H0)

    # ---- encoder layer 2 ----
    im2 = jnp.concatenate(
        [_im2col(h1[b * L1:(b + 1) * L1, :], W1_, S1, L2) for b in range(B)], axis=0)
    h2 = dotf(im2, w2) + b2v                                       # (B*L2, H1)

    # ---- fclayer: window spans the whole remaining length -> one row per batch ----
    im3 = jnp.concatenate(
        [_im2col(h2[b * L2:(b + 1) * L2, :], W2_, S2, 1) for b in range(B)], axis=0)
    hid = dotf(im3, w3) + b3v                                      # (B, H2) bottleneck

    # ---- de_fclayer: one matmul, split lanes back into W2_ rows per batch ----
    y1f = dotf(hid, wd3) + bd3v                                    # (B, W2_*H1)
    y1 = jnp.concatenate(
        [jnp.concatenate([y1f[b:b + 1, i * H1:(i + 1) * H1] for i in range(W2_)], axis=0)
         for b in range(B)], axis=0)                               # (B*W2_, H1)

    # ---- de_layer2: matmul + static col2im scatter ----
    z2 = dotf(y1, wd2)                                             # (B*W2_, W1_*H0)
    y2 = jnp.concatenate(
        [_col2im(z2[b * W2_:(b + 1) * W2_, :], W1_, S1, L1, H0) for b in range(B)],
        axis=0) + bd2v                                             # (B*L1, H0)

    # ---- de_layer1 ----
    z1 = dotf(y2, wd1)                                             # (B*L1, W0*D)
    y3 = jnp.concatenate(
        [_col2im(z1[b * L1:(b + 1) * L1, :], W0, S0, L, D) for b in range(B)],
        axis=0) + bd1v                                             # (B*L, D) reconstruction

    # ---- decode: logits = reconstruction @ E^T (lane-dense, V padded to 128) ----
    out_ref[...] = dotf(y3, et)                                    # (B*L, 128)


# ------------------------------- wrapper --------------------------------------
def tdae_forward_pallas(emb, wpack):
    """emb: (B, L, D) word embeddings. Returns decoded logits (B*L, V)."""
    x2d = emb.reshape(B * L, D).astype(jnp.float32)
    out = pl.pallas_call(
        _tdae_kernel,
        out_shape=jax.ShapeDtypeStruct((B * L, LANES), jnp.float32),
    )(x2d, wpack)
    return out[:, :V]


# ------------------------ deterministic parameter init ------------------------
def init_params():
    ks = jax.random.split(jax.random.PRNGKey(0), 13)
    nrm = lambda k, s, sc=0.1: (sc * jax.random.normal(k, s)).astype(jnp.float32)
    E   = nrm(ks[0], (V, D), 1.0)                                   # nn.Embedding weight
    W1  = nrm(ks[1], (H0, 1, W0, D));   b1  = nrm(ks[2],  (H0,), 0.01)
    W2  = nrm(ks[3], (H1, 1, W1_, H0)); b2  = nrm(ks[4],  (H1,), 0.01)
    W3  = nrm(ks[5], (H2, 1, W2_, H1)); b3  = nrm(ks[6],  (H2,), 0.01)
    Wd3 = nrm(ks[7], (H2, 1, W2_, H1)); bd3 = nrm(ks[8],  (1,),  0.01)
    Wd2 = nrm(ks[9], (H1, 1, W1_, H0)); bd2 = nrm(ks[10], (1,),  0.01)
    Wd1 = nrm(ks[11], (H0, 1, W0, D));  bd1 = nrm(ks[12], (1,),  0.01)

    # contraction-ready flats for the im2col / col2im matmuls
    w1f  = jnp.transpose(W1[:, 0], (1, 2, 0)).reshape(W0 * D, H0)
    w2f  = jnp.transpose(W2[:, 0], (1, 2, 0)).reshape(W1_ * H0, H1)
    w3f  = jnp.transpose(W3[:, 0], (1, 2, 0)).reshape(W2_ * H1, H2)
    wd3f = Wd3[:, 0].reshape(H2, W2_ * H1)
    wd2f = Wd2[:, 0].reshape(H1, W1_ * H0)
    wd1f = Wd1[:, 0].reshape(H0, W0 * D)

    # single packed weight operand (one DMA into VMEM)
    wp = jnp.zeros((RPACK, LANES), jnp.float32)
    wp = wp.at[R_W1:R_W1 + W0 * D, :H0].set(w1f)
    wp = wp.at[R_W2:R_W2 + W1_ * H0, :H1].set(w2f)
    wp = wp.at[R_W3:R_W3 + W2_ * H1, :H2].set(w3f)
    wp = wp.at[R_WD3:R_WD3 + H2, :W2_ * H1].set(wd3f)
    wp = wp.at[R_WD2:R_WD2 + H1, :W1_ * H0].set(wd2f)
    wp = wp.at[R_WD1:R_WD1 + H0, :W0 * D].set(wd1f)
    wp = wp.at[R_ET:R_ET + D, :V].set(E.T)
    wp = wp.at[R_BIAS, B1_OFF:B1_OFF + H0].set(b1)
    wp = wp.at[R_BIAS, B2_OFF:B2_OFF + H1].set(b2)
    wp = wp.at[R_BIAS, B3_OFF:B3_OFF + H2].set(b3)
    wp = wp.at[R_BIAS, BD3_OFF].set(bd3[0])
    wp = wp.at[R_BIAS, BD2_OFF].set(bd2[0])
    wp = wp.at[R_BIAS, BD1_OFF].set(bd1[0])

    p = dict(
        E=E, Et=E.T, wpack=wp,
        # per-offset layouts kept only for the independent pure-JAX reference
        w1k=jnp.transpose(W1[:, 0], (1, 2, 0)), b1=b1.reshape(1, H0),
        w2k=jnp.transpose(W2[:, 0], (1, 2, 0)), b2=b2.reshape(1, H1),
        w3k=jnp.transpose(W3[:, 0], (1, 2, 0)), b3=b3.reshape(1, H2),
        wd3k=jnp.transpose(Wd3[:, 0], (1, 0, 2)), bd3=bd3.reshape(1, 1),
        wd2k=jnp.transpose(Wd2[:, 0], (1, 0, 2)), bd2=bd2.reshape(1, 1),
        wd1k=jnp.transpose(Wd1[:, 0], (1, 0, 2)), bd1=bd1.reshape(1, 1),
    )
    return p


# -------------------------- pure-JAX reference check --------------------------
def tdae_forward_ref(emb, p):
    def conv(x, wk, b, s):   # x (B, Lin, Cin), wk (w, Cin, Cout)
        w = wk.shape[0]
        Lout = (x.shape[1] - w) // s + 1
        out = jnp.zeros((x.shape[0], Lout, wk.shape[2]), jnp.float32)
        for i in range(w):
            out = out + jnp.einsum("blc,cd->bld",
                                   x[:, i:i + (Lout - 1) * s + 1:s, :], wk[i])
        return out + b

    def deconv(x, wk, b, s, Lout):   # x (B, Lin, Cin), wk (w, Cin, Cout)
        out = jnp.zeros((x.shape[0], Lout, wk.shape[2]), jnp.float32)
        for pp in range(x.shape[1]):
            for i in range(wk.shape[0]):
                out = out.at[:, pp * s + i, :].add(x[:, pp, :] @ wk[i])
        return out + b

    h1 = conv(emb, p["w1k"], p["b1"], S0)
    h2 = conv(h1, p["w2k"], p["b2"], S1)
    hid = conv(h2, p["w3k"], p["b3"], S2)[:, 0, :]
    y1 = jnp.einsum("bh,ihc->bic", hid, p["wd3k"]) + p["bd3"]
    y2 = deconv(y1, p["wd2k"], p["bd2"], S1, L1)
    y3 = deconv(y2, p["wd1k"], p["bd1"], S0, L)
    dec = jnp.einsum("bld,dv->blv", y3, p["Et"])
    return dec.reshape(B * L, V)


# ----------------------------------- main --------------------------------------
if __name__ == "__main__":
    params = init_params()
    text = jax.random.randint(jax.random.PRNGKey(1), (B, L), 0, V)   # batch.text
    # Embedding lookup (nn.Embedding gather) kept as JAX glue.
    emb = jnp.take(params["E"], text, axis=0).astype(jnp.float32)    # (B, L, D)

    out = jax.block_until_ready(tdae_forward_pallas(emb, params["wpack"]))
    ref = jax.block_until_ready(tdae_forward_ref(emb, params))

    assert out.shape == (B * L, V)
    assert jnp.allclose(out, ref, atol=2e-3, rtol=2e-3), "mismatch vs reference"
    print("KERNEL_OK")
</pallas_src>

<mosaic_0001>
module attributes {stable_mosaic.version = 11 : i64} {
  func.func @_tdae_kernel(%arg0: memref<38x16xf32, #tpu.memory_space<vmem>>, %arg1: memref<189x128xf32, #tpu.memory_space<vmem>>, %arg2: memref<38x128xf32, #tpu.memory_space<vmem>>) attributes {dimension_semantics = [], scalar_prefetch = 0 : i64, scratch_operands = 0 : i64, tpu.core_type = #tpu.core_type<tc>} {
    %c0 = arith.constant 0 : index
    %c0_0 = arith.constant 0 : index
    %0 = vector.load %arg1[%c0, %c0_0] : memref<189x128xf32, #tpu.memory_space<vmem>>, vector<48x8xf32>
    %c48 = arith.constant 48 : index
    %c0_1 = arith.constant 0 : index
    %1 = vector.load %arg1[%c48, %c0_1] : memref<189x128xf32, #tpu.memory_space<vmem>>, vector<24x16xf32>
    %c72 = arith.constant 72 : index
    %c0_2 = arith.constant 0 : index
    %2 = vector.load %arg1[%c72, %c0_2] : memref<189x128xf32, #tpu.memory_space<vmem>>, vector<64x12xf32>
    %c136 = arith.constant 136 : index
    %c0_3 = arith.constant 0 : index
    %3 = vector.load %arg1[%c136, %c0_3] : memref<189x128xf32, #tpu.memory_space<vmem>>, vector<12x64xf32>
    %c148 = arith.constant 148 : index
    %c0_4 = arith.constant 0 : index
    %4 = vector.load %arg1[%c148, %c0_4] : memref<189x128xf32, #tpu.memory_space<vmem>>, vector<16x24xf32>
    %c164 = arith.constant 164 : index
    %c0_5 = arith.constant 0 : index
    %5 = vector.load %arg1[%c164, %c0_5] : memref<189x128xf32, #tpu.memory_space<vmem>>, vector<8x48xf32>
    %c172 = arith.constant 172 : index
    %c0_6 = arith.constant 0 : index
    %6 = vector.load %arg1[%c172, %c0_6] : memref<189x128xf32, #tpu.memory_space<vmem>>, vector<16x128xf32>
    %c188 = arith.constant 188 : index
    %c0_7 = arith.constant 0 : index
    %7 = vector.load %arg1[%c188, %c0_7] : memref<189x128xf32, #tpu.memory_space<vmem>>, vector<1x128xf32>
    %8 = vector.extract_strided_slice %7 {offsets = [0, 0], sizes = [1, 8], strides = [1, 1]} : vector<1x128xf32> to vector<1x8xf32>
    %9 = vector.extract_strided_slice %7 {offsets = [0, 8], sizes = [1, 16], strides = [1, 1]} : vector<1x128xf32> to vector<1x16xf32>
    %10 = vector.extract_strided_slice %7 {offsets = [0, 24], sizes = [1, 12], strides = [1, 1]} : vector<1x128xf32> to vector<1x12xf32>
    %11 = vector.extract_strided_slice %7 {offsets = [0, 36], sizes = [1, 1], strides = [1, 1]} : vector<1x128xf32> to vector<1x1xf32>
    %12 = vector.extract_strided_slice %7 {offsets = [0, 37], sizes = [1, 1], strides = [1, 1]} : vector<1x128xf32> to vector<1x1xf32>
    %13 = vector.extract_strided_slice %7 {offsets = [0, 38], sizes = [1, 1], strides = [1, 1]} : vector<1x128xf32> to vector<1x1xf32>
    %c0_8 = arith.constant 0 : index
    %c0_9 = arith.constant 0 : index
    %14 = tpu.strided_load %arg0[%c0_8, %c0_9] {strides = array<i32: 2, 1>} : memref<38x16xf32, #tpu.memory_space<vmem>>, vector<9x16xf32>
    %c1 = arith.constant 1 : index
    %c0_10 = arith.constant 0 : index
    %15 = tpu.strided_load %arg0[%c1, %c0_10] {strides = array<i32: 2, 1>} : memref<38x16xf32, #tpu.memory_space<vmem>>, vector<9x16xf32>
    %c2 = arith.constant 2 : index
    %c0_11 = arith.constant 0 : index
    %16 = tpu.strided_load %arg0[%c2, %c0_11] {strides = array<i32: 2, 1>} : memref<38x16xf32, #tpu.memory_space<vmem>>, vector<9x16xf32>
    %17 = tpu.concatenate %14, %15, %16 in 1 : vector<9x16xf32>, vector<9x16xf32>, vector<9x16xf32> -> vector<9x48xf32>
    %c19 = arith.constant 19 : index
    %c0_12 = arith.constant 0 : index
    %18 = tpu.strided_load %arg0[%c19, %c0_12] {strides = array<i32: 2, 1>} : memref<38x16xf32, #tpu.memory_space<vmem>>, vector<9x16xf32>
    %c20 = arith.constant 20 : index
    %c0_13 = arith.constant 0 : index
    %19 = tpu.strided_load %arg0[%c20, %c0_13] {strides = array<i32: 2, 1>} : memref<38x16xf32, #tpu.memory_space<vmem>>, vector<9x16xf32>
    %c21 = arith.constant 21 : index
    %c0_14 = arith.constant 0 : index
    %20 = tpu.strided_load %arg0[%c21, %c0_14] {strides = array<i32: 2, 1>} : memref<38x16xf32, #tpu.memory_space<vmem>>, vector<9x16xf32>
    %21 = tpu.concatenate %18, %19, %20 in 1 : vector<9x16xf32>, vector<9x16xf32>, vector<9x16xf32> -> vector<9x48xf32>
    %22 = tpu.concatenate %17, %21 in 0 : vector<9x48xf32>, vector<9x48xf32> -> vector<18x48xf32>
    %cst = arith.constant dense<0.000000e+00> : vector<18x8xf32>
    %23 = tpu.matmul %22, %0, %cst {dimension_numbers = #tpu.dot_dimension_numbers<[1], [0], [0], [1], [0, 0, 1, 1], [], []>} : vector<18x48xf32>, vector<48x8xf32>, vector<18x8xf32> -> vector<18x8xf32>
    %24 = vector.broadcast %8 : vector<1x8xf32> to vector<18x8xf32>
    %25 = arith.addf %23, %24 : vector<18x8xf32>
    %26 = vector.extract_strided_slice %25 {offsets = [0, 0], sizes = [9, 8], strides = [1, 1]} : vector<18x8xf32> to vector<9x8xf32>
    %27 = vector.extract_strided_slice %26 {offsets = [0, 0], sizes = [1, 8], strides = [1, 1]} : vector<9x8xf32> to vector<1x8xf32>
    %28 = vector.extract_strided_slice %26 {offsets = [1, 0], sizes = [1, 8], strides = [1, 1]} : vector<9x8xf32> to vector<1x8xf32>
    %29 = vector.extract_strided_slice %26 {offsets = [2, 0], sizes = [1, 8], strides = [1, 1]} : vector<9x8xf32> to vector<1x8xf32>
    %30 = tpu.concatenate %27, %28, %29 in 1 : vector<1x8xf32>, vector<1x8xf32>, vector<1x8xf32> -> vector<1x24xf32>
    %31 = vector.extract_strided_slice %26 {offsets = [2, 0], sizes = [1, 8], strides = [1, 1]} : vector<9x8xf32> to vector<1x8xf32>
    %32 = vector.extract_strided_slice %26 {offsets = [3, 0], sizes = [1, 8], strides = [1, 1]} : vector<9x8xf32> to vector<1x8xf32>
    %33 = vector.extract_strided_slice %26 {offsets = [4, 0], sizes = [1, 8], strides = [1, 1]} : vector<9x8xf32> to vector<1x8xf32>
    %34 = tpu.concatenate %31, %32, %33 in 1 : vector<1x8xf32>, vector<1x8xf32>, vector<1x8xf32> -> vector<1x24xf32>
    %35 = vector.extract_strided_slice %26 {offsets = [4, 0], sizes = [1, 8], strides = [1, 1]} : vector<9x8xf32> to vector<1x8xf32>
    %36 = vector.extract_strided_slice %26 {offsets = [5, 0], sizes = [1, 8], strides = [1, 1]} : vector<9x8xf32> to vector<1x8xf32>
    %37 = vector.extract_strided_slice %26 {offsets = [6, 0], sizes = [1, 8], strides = [1, 1]} : vector<9x8xf32> to vector<1x8xf32>
    %38 = tpu.concatenate %35, %36, %37 in 1 : vector<1x8xf32>, vector<1x8xf32>, vector<1x8xf32> -> vector<1x24xf32>
    %39 = vector.extract_strided_slice %26 {offsets = [6, 0], sizes = [1, 8], strides = [1, 1]} : vector<9x8xf32> to vector<1x8xf32>
    %40 = vector.extract_strided_slice %26 {offsets = [7, 0], sizes = [1, 8], strides = [1, 1]} : vector<9x8xf32> to vector<1x8xf32>
    %41 = vector.extract_strided_slice %26 {offsets = [8, 0], sizes = [1, 8], strides = [1, 1]} : vector<9x8xf32> to vector<1x8xf32>
    %42 = tpu.concatenate %39, %40, %41 in 1 : vector<1x8xf32>, vector<1x8xf32>, vector<1x8xf32> -> vector<1x24xf32>
    %43 = tpu.concatenate %30, %34, %38, %42 in 0 : vector<1x24xf32>, vector<1x24xf32>, vector<1x24xf32>, vector<1x24xf32> -> vector<4x24xf32>
    %44 = vector.extract_strided_slice %25 {offsets = [9, 0], sizes = [9, 8], strides = [1, 1]} : vector<18x8xf32> to vector<9x8xf32>
    %45 = vector.extract_strided_slice %44 {offsets = [0, 0], sizes = [1, 8], strides = [1, 1]} : vector<9x8xf32> to vector<1x8xf32>
    %46 = vector.extract_strided_slice %44 {offsets = [1, 0], sizes = [1, 8], strides = [1, 1]} : vector<9x8xf32> to vector<1x8xf32>
    %47 = vector.extract_strided_slice %44 {offsets = [2, 0], sizes = [1, 8], strides = [1, 1]} : vector<9x8xf32> to vector<1x8xf32>
    %48 = tpu.concatenate %45, %46, %47 in 1 : vector<1x8xf32>, vector<1x8xf32>, vector<1x8xf32> -> vector<1x24xf32>
    %49 = vector.extract_strided_slice %44 {offsets = [2, 0], sizes = [1, 8], strides = [1, 1]} : vector<9x8xf32> to vector<1x8xf32>
    %50 = vector.extract_strided_slice %44 {offsets = [3, 0], sizes = [1, 8], strides = [1, 1]} : vector<9x8xf32> to vector<1x8xf32>
    %51 = vector.extract_strided_slice %44 {offsets = [4, 0], sizes = [1, 8], strides = [1, 1]} : vector<9x8xf32> to vector<1x8xf32>
    %52 = tpu.concatenate %49, %50, %51 in 1 : vector<1x8xf32>, vector<1x8xf32>, vector<1x8xf32> -> vector<1x24xf32>
    %53 = vector.extract_strided_slice %44 {offsets = [4, 0], sizes = [1, 8], strides = [1, 1]} : vector<9x8xf32> to vector<1x8xf32>
    %54 = vector.extract_strided_slice %44 {offsets = [5, 0], sizes = [1, 8], strides = [1, 1]} : vector<9x8xf32> to vector<1x8xf32>
    %55 = vector.extract_strided_slice %44 {offsets = [6, 0], sizes = [1, 8], strides = [1, 1]} : vector<9x8xf32> to vector<1x8xf32>
    %56 = tpu.concatenate %53, %54, %55 in 1 : vector<1x8xf32>, vector<1x8xf32>, vector<1x8xf32> -> vector<1x24xf32>
    %57 = vector.extract_strided_slice %44 {offsets = [6, 0], sizes = [1, 8], strides = [1, 1]} : vector<9x8xf32> to vector<1x8xf32>
    %58 = vector.extract_strided_slice %44 {offsets = [7, 0], sizes = [1, 8], strides = [1, 1]} : vector<9x8xf32> to vector<1x8xf32>
    %59 = vector.extract_strided_slice %44 {offsets = [8, 0], sizes = [1, 8], strides = [1, 1]} : vector<9x8xf32> to vector<1x8xf32>
    %60 = tpu.concatenate %57, %58, %59 in 1 : vector<1x8xf32>, vector<1x8xf32>, vector<1x8xf32> -> vector<1x24xf32>
    %61 = tpu.concatenate %48, %52, %56, %60 in 0 : vector<1x24xf32>, vector<1x24xf32>, vector<1x24xf32>, vector<1x24xf32> -> vector<4x24xf32>
    %62 = tpu.concatenate %43, %61 in 0 : vector<4x24xf32>, vector<4x24xf32> -> vector<8x24xf32>
    %cst_15 = arith.constant dense<0.000000e+00> : vector<8x16xf32>
    %63 = tpu.matmul %62, %1, %cst_15 {dimension_numbers = #tpu.dot_dimension_numbers<[1], [0], [0], [1], [0, 0, 1, 1], [], []>} : vector<8x24xf32>, vector<24x16xf32>, vector<8x16xf32> -> vector<8x16xf32>
    %64 = vector.broadcast %9 : vector<1x16xf32> to vector<8x16xf32>
    %65 = arith.addf %63, %64 : vector<8x16xf32>
    %66 = vector.extract_strided_slice %65 {offsets = [0, 0], sizes = [4, 16], strides = [1, 1]} : vector<8x16xf32> to vector<4x16xf32>
    %67 = vector.extract_strided_slice %66 {offsets = [0, 0], sizes = [1, 16], strides = [1, 1]} : vector<4x16xf32> to vector<1x16xf32>
    %68 = vector.extract_strided_slice %66 {offsets = [1, 0], sizes = [1, 16], strides = [1, 1]} : vector<4x16xf32> to vector<1x16xf32>
    %69 = vector.extract_strided_slice %66 {offsets = [2, 0], sizes = [1, 16], strides = [1, 1]} : vector<4x16xf32> to vector<1x16xf32>
    %70 = vector.extract_strided_slice %66 {offsets = [3, 0], sizes = [1, 16], strides = [1, 1]} : vector<4x16xf32> to vector<1x16xf32>
    %71 = tpu.concatenate %67, %68, %69, %70 in 1 : vector<1x16xf32>, vector<1x16xf32>, vector<1x16xf32>, vector<1x16xf32> -> vector<1x64xf32>
    %72 = vector.extract_strided_slice %65 {offsets = [4, 0], sizes = [4, 16], strides = [1, 1]} : vector<8x16xf32> to vector<4x16xf32>
    %73 = vector.extract_strided_slice %72 {offsets = [0, 0], sizes = [1, 16], strides = [1, 1]} : vector<4x16xf32> to vector<1x16xf32>
    %74 = vector.extract_strided_slice %72 {offsets = [1, 0], sizes = [1, 16], strides = [1, 1]} : vector<4x16xf32> to vector<1x16xf32>
    %75 = vector.extract_strided_slice %72 {offsets = [2, 0], sizes = [1, 16], strides = [1, 1]} : vector<4x16xf32> to vector<1x16xf32>
    %76 = vector.extract_strided_slice %72 {offsets = [3, 0], sizes = [1, 16], strides = [1, 1]} : vector<4x16xf32> to vector<1x16xf32>
    %77 = tpu.concatenate %73, %74, %75, %76 in 1 : vector<1x16xf32>, vector<1x16xf32>, vector<1x16xf32>, vector<1x16xf32> -> vector<1x64xf32>
    %78 = tpu.concatenate %71, %77 in 0 : vector<1x64xf32>, vector<1x64xf32> -> vector<2x64xf32>
    %cst_16 = arith.constant dense<0.000000e+00> : vector<2x12xf32>
    %79 = tpu.matmul %78, %2, %cst_16 {dimension_numbers = #tpu.dot_dimension_numbers<[1], [0], [0], [1], [0, 0, 1, 1], [], []>} : vector<2x64xf32>, vector<64x12xf32>, vector<2x12xf32> -> vector<2x12xf32>
    %80 = vector.broadcast %10 : vector<1x12xf32> to vector<2x12xf32>
    %81 = arith.addf %79, %80 : vector<2x12xf32>
    %cst_17 = arith.constant dense<0.000000e+00> : vector<2x64xf32>
    %82 = tpu.matmul %81, %3, %cst_17 {dimension_numbers = #tpu.dot_dimension_numbers<[1], [0], [0], [1], [0, 0, 1, 1], [], []>} : vector<2x12xf32>, vector<12x64xf32>, vector<2x64xf32> -> vector<2x64xf32>
    %83 = vector.broadcast %11 : vector<1x1xf32> to vector<2x64xf32>
    %84 = arith.addf %82, %83 : vector<2x64xf32>
    %85 = vector.extract_strided_slice %84 {offsets = [0, 0], sizes = [1, 16], strides = [1, 1]} : vector<2x64xf32> to vector<1x16xf32>
    %86 = vector.extract_strided_slice %84 {offsets = [0, 16], sizes = [1, 16], strides = [1, 1]} : vector<2x64xf32> to vector<1x16xf32>
    %87 = vector.extract_strided_slice %84 {offsets = [0, 32], sizes = [1, 16], strides = [1, 1]} : vector<2x64xf32> to vector<1x16xf32>
    %88 = vector.extract_strided_slice %84 {offsets = [0, 48], sizes = [1, 16], strides = [1, 1]} : vector<2x64xf32> to vector<1x16xf32>
    %89 = tpu.concatenate %85, %86, %87, %88 in 0 : vector<1x16xf32>, vector<1x16xf32>, vector<1x16xf32>, vector<1x16xf32> -> vector<4x16xf32>
    %90 = vector.extract_strided_slice %84 {offsets = [1, 0], sizes = [1, 16], strides = [1, 1]} : vector<2x64xf32> to vector<1x16xf32>
    %91 = vector.extract_strided_slice %84 {offsets = [1, 16], sizes = [1, 16], strides = [1, 1]} : vector<2x64xf32> to vector<1x16xf32>
    %92 = vector.extract_strided_slice %84 {offsets = [1, 32], sizes = [1, 16], strides = [1, 1]} : vector<2x64xf32> to vector<1x16xf32>
    %93 = vector.extract_strided_slice %84 {offsets = [1, 48], sizes = [1, 16], strides = [1, 1]} : vector<2x64xf32> to vector<1x16xf32>
    %94 = tpu.concatenate %90, %91, %92, %93 in 0 : vector<1x16xf32>, vector<1x16xf32>, vector<1x16xf32>, vector<1x16xf32> -> vector<4x16xf32>
    %95 = tpu.concatenate %89, %94 in 0 : vector<4x16xf32>, vector<4x16xf32> -> vector<8x16xf32>
    %cst_18 = arith.constant dense<0.000000e+00> : vector<8x24xf32>
    %96 = tpu.matmul %95, %4, %cst_18 {dimension_numbers = #tpu.dot_dimension_numbers<[1], [0], [0], [1], [0, 0, 1, 1], [], []>} : vector<8x16xf32>, vector<16x24xf32>, vector<8x24xf32> -> vector<8x24xf32>
    %97 = vector.extract_strided_slice %96 {offsets = [0, 0], sizes = [4, 24], strides = [1, 1]} : vector<8x24xf32> to vector<4x24xf32>
    %98 = vector.extract_strided_slice %97 {offsets = [0, 0], sizes = [1, 8], strides = [1, 1]} : vector<4x24xf32> to vector<1x8xf32>
    %99 = vector.extract_strided_slice %97 {offsets = [0, 8], sizes = [1, 8], strides = [1, 1]} : vector<4x24xf32> to vector<1x8xf32>
    %100 = vector.extract_strided_slice %97 {offsets = [1, 0], sizes = [1, 8], strides = [1, 1]} : vector<4x24xf32> to vector<1x8xf32>
    %101 = vector.extract_strided_slice %97 {offsets = [0, 16], sizes = [1, 8], strides = [1, 1]} : vector<4x24xf32> to vector<1x8xf32>
    %102 = arith.addf %100, %101 : vector<1x8xf32>
    %103 = vector.extract_strided_slice %97 {offsets = [1, 8], sizes = [1, 8], strides = [1, 1]} : vector<4x24xf32> to vector<1x8xf32>
    %104 = vector.extract_strided_slice %97 {offsets = [2, 0], sizes = [1, 8], strides = [1, 1]} : vector<4x24xf32> to vector<1x8xf32>
    %105 = vector.extract_strided_slice %97 {offsets = [1, 16], sizes = [1, 8], strides = [1, 1]} : vector<4x24xf32> to vector<1x8xf32>
    %106 = arith.addf %104, %105 : vector<1x8xf32>
    %107 = vector.extract_strided_slice %97 {offsets = [2, 8], sizes = [1, 8], strides = [1, 1]} : vector<4x24xf32> to vector<1x8xf32>
    %108 = vector.extract_strided_slice %97 {offsets = [3, 0], sizes = [1, 8], strides = [1, 1]} : vector<4x24xf32> to vector<1x8xf32>
    %109 = vector.extract_strided_slice %97 {offsets = [2, 16], sizes = [1, 8], strides = [1, 1]} : vector<4x24xf32> to vector<1x8xf32>
    %110 = arith.addf %108, %109 : vector<1x8xf32>
    %111 = vector.extract_strided_slice %97 {offsets = [3, 8], sizes = [1, 8], strides = [1, 1]} : vector<4x24xf32> to vector<1x8xf32>
    %112 = vector.extract_strided_slice %97 {offsets = [3, 16], sizes = [1, 8], strides = [1, 1]} : vector<4x24xf32> to vector<1x8xf32>
    %113 = tpu.concatenate %98, %99, %102, %103, %106, %107, %110, %111, %112 in 0 : vector<1x8xf32>, vector<1x8xf32>, vector<1x8xf32>, vector<1x8xf32>, vector<1x8xf32>, vector<1x8xf32>, vector<1x8xf32>, vector<1x8xf32>, vector<1x8xf32> -> vector<9x8xf32>
    %114 = vector.extract_strided_slice %96 {offsets = [4, 0], sizes = [4, 24], strides = [1, 1]} : vector<8x24xf32> to vector<4x24xf32>
    %115 = vector.extract_strided_slice %114 {offsets = [0, 0], sizes = [1, 8], strides = [1, 1]} : vector<4x24xf32> to vector<1x8xf32>
    %116 = vector.extract_strided_slice %114 {offsets = [0, 8], sizes = [1, 8], strides = [1, 1]} : vector<4x24xf32> to vector<1x8xf32>
    %117 = vector.extract_strided_slice %114 {offsets = [1, 0], sizes = [1, 8], strides = [1, 1]} : vector<4x24xf32> to vector<1x8xf32>
    %118 = vector.extract_strided_slice %114 {offsets = [0, 16], sizes = [1, 8], strides = [1, 1]} : vector<4x24xf32> to vector<1x8xf32>
    %119 = arith.addf %117, %118 : vector<1x8xf32>
    %120 = vector.extract_strided_slice %114 {offsets = [1, 8], sizes = [1, 8], strides = [1, 1]} : vector<4x24xf32> to vector<1x8xf32>
    %121 = vector.extract_strided_slice %114 {offsets = [2, 0], sizes = [1, 8], strides = [1, 1]} : vector<4x24xf32> to vector<1x8xf32>
    %122 = vector.extract_strided_slice %114 {offsets = [1, 16], sizes = [1, 8], strides = [1, 1]} : vector<4x24xf32> to vector<1x8xf32>
    %123 = arith.addf %121, %122 : vector<1x8xf32>
    %124 = vector.extract_strided_slice %114 {offsets = [2, 8], sizes = [1, 8], strides = [1, 1]} : vector<4x24xf32> to vector<1x8xf32>
    %125 = vector.extract_strided_slice %114 {offsets = [3, 0], sizes = [1, 8], strides = [1, 1]} : vector<4x24xf32> to vector<1x8xf32>
    %126 = vector.extract_strided_slice %114 {offsets = [2, 16], sizes = [1, 8], strides = [1, 1]} : vector<4x24xf32> to vector<1x8xf32>
    %127 = arith.addf %125, %126 : vector<1x8xf32>
    %128 = vector.extract_strided_slice %114 {offsets = [3, 8], sizes = [1, 8], strides = [1, 1]} : vector<4x24xf32> to vector<1x8xf32>
    %129 = vector.extract_strided_slice %114 {offsets = [3, 16], sizes = [1, 8], strides = [1, 1]} : vector<4x24xf32> to vector<1x8xf32>
    %130 = tpu.concatenate %115, %116, %119, %120, %123, %124, %127, %128, %129 in 0 : vector<1x8xf32>, vector<1x8xf32>, vector<1x8xf32>, vector<1x8xf32>, vector<1x8xf32>, vector<1x8xf32>, vector<1x8xf32>, vector<1x8xf32>, vector<1x8xf32> -> vector<9x8xf32>
    %131 = tpu.concatenate %113, %130 in 0 : vector<9x8xf32>, vector<9x8xf32> -> vector<18x8xf32>
    %132 = vector.broadcast %12 : vector<1x1xf32> to vector<18x8xf32>
    %133 = arith.addf %131, %132 : vector<18x8xf32>
    %cst_19 = arith.constant dense<0.000000e+00> : vector<18x48xf32>
    %134 = tpu.matmul %133, %5, %cst_19 {dimension_numbers = #tpu.dot_dimension_numbers<[1], [0], [0], [1], [0, 0, 1, 1], [], []>} : vector<18x8xf32>, vector<8x48xf32>, vector<18x48xf32> -> vector<18x48xf32>
    %135 = vector.extract_strided_slice %134 {offsets = [0, 0], sizes = [9, 48], strides = [1, 1]} : vector<18x48xf32> to vector<9x48xf32>
    %136 = vector.extract_strided_slice %135 {offsets = [0, 0], sizes = [1, 16], strides = [1, 1]} : vector<9x48xf32> to vector<1x16xf32>
    %137 = vector.extract_strided_slice %135 {offsets = [0, 16], sizes = [1, 16], strides = [1, 1]} : vector<9x48xf32> to vector<1x16xf32>
    %138 = vector.extract_strided_slice %135 {offsets = [1, 0], sizes = [1, 16], strides = [1, 1]} : vector<9x48xf32> to vector<1x16xf32>
    %139 = vector.extract_strided_slice %135 {offsets = [0, 32], sizes = [1, 16], strides = [1, 1]} : vector<9x48xf32> to vector<1x16xf32>
    %140 = arith.addf %138, %139 : vector<1x16xf32>
    %141 = vector.extract_strided_slice %135 {offsets = [1, 16], sizes = [1, 16], strides = [1, 1]} : vector<9x48xf32> to vector<1x16xf32>
    %142 = vector.extract_strided_slice %135 {offsets = [2, 0], sizes = [1, 16], strides = [1, 1]} : vector<9x48xf32> to vector<1x16xf32>
    %143 = vector.extract_strided_slice %135 {offsets = [1, 32], sizes = [1, 16], strides = [1, 1]} : vector<9x48xf32> to vector<1x16xf32>
    %144 = arith.addf %142, %143 : vector<1x16xf32>
    %145 = vector.extract_strided_slice %135 {offsets = [2, 16], sizes = [1, 16], strides = [1, 1]} : vector<9x48xf32> to vector<1x16xf32>
    %146 = vector.extract_strided_slice %135 {offsets = [3, 0], sizes = [1, 16], strides = [1, 1]} : vector<9x48xf32> to vector<1x16xf32>
    %147 = vector.extract_strided_slice %135 {offsets = [2, 32], sizes = [1, 16], strides = [1, 1]} : vector<9x48xf32> to vector<1x16xf32>
    %148 = arith.addf %146, %147 : vector<1x16xf32>
    %149 = vector.extract_strided_slice %135 {offsets = [3, 16], sizes = [1, 16], strides = [1, 1]} : vector<9x48xf32> to vector<1x16xf32>
    %150 = vector.extract_strided_slice %135 {offsets = [4, 0], sizes = [1, 16], strides = [1, 1]} : vector<9x48xf32> to vector<1x16xf32>
    %151 = vector.extract_strided_slice %135 {offsets = [3, 32], sizes = [1, 16], strides = [1, 1]} : vector<9x48xf32> to vector<1x16xf32>
    %152 = arith.addf %150, %151 : vector<1x16xf32>
    %153 = vector.extract_strided_slice %135 {offsets = [4, 16], sizes = [1, 16], strides = [1, 1]} : vector<9x48xf32> to vector<1x16xf32>
    %154 = vector.extract_strided_slice %135 {offsets = [5, 0], sizes = [1, 16], strides = [1, 1]} : vector<9x48xf32> to vector<1x16xf32>
    %155 = vector.extract_strided_slice %135 {offsets = [4, 32], sizes = [1, 16], strides = [1, 1]} : vector<9x48xf32> to vector<1x16xf32>
    %156 = arith.addf %154, %155 : vector<1x16xf32>
    %157 = vector.extract_strided_slice %135 {offsets = [5, 16], sizes = [1, 16], strides = [1, 1]} : vector<9x48xf32> to vector<1x16xf32>
    %158 = vector.extract_strided_slice %135 {offsets = [6, 0], sizes = [1, 16], strides = [1, 1]} : vector<9x48xf32> to vector<1x16xf32>
    %159 = vector.extract_strided_slice %135 {offsets = [5, 32], sizes = [1, 16], strides = [1, 1]} : vector<9x48xf32> to vector<1x16xf32>
    %160 = arith.addf %158, %159 : vector<1x16xf32>
    %161 = vector.extract_strided_slice %135 {offsets = [6, 16], sizes = [1, 16], strides = [1, 1]} : vector<9x48xf32> to vector<1x16xf32>
    %162 = vector.extract_strided_slice %135 {offsets = [7, 0], sizes = [1, 16], strides = [1, 1]} : vector<9x48xf32> to vector<1x16xf32>
    %163 = vector.extract_strided_slice %135 {offsets = [6, 32], sizes = [1, 16], strides = [1, 1]} : vector<9x48xf32> to vector<1x16xf32>
    %164 = arith.addf %162, %163 : vector<1x16xf32>
    %165 = vector.extract_strided_slice %135 {offsets = [7, 16], sizes = [1, 16], strides = [1, 1]} : vector<9x48xf32> to vector<1x16xf32>
    %166 = vector.extract_strided_slice %135 {offsets = [8, 0], sizes = [1, 16], strides = [1, 1]} : vector<9x48xf32> to vector<1x16xf32>
    %167 = vector.extract_strided_slice %135 {offsets = [7, 32], sizes = [1, 16], strides = [1, 1]} : vector<9x48xf32> to vector<1x16xf32>
    %168 = arith.addf %166, %167 : vector<1x16xf32>
    %169 = vector.extract_strided_slice %135 {offsets = [8, 16], sizes = [1, 16], strides = [1, 1]} : vector<9x48xf32> to vector<1x16xf32>
    %170 = vector.extract_strided_slice %135 {offsets = [8, 32], sizes = [1, 16], strides = [1, 1]} : vector<9x48xf32> to vector<1x16xf32>
    %171 = tpu.concatenate %136, %137, %140, %141, %144, %145, %148, %149, %152, %153, %156, %157, %160, %161, %164, %165 in 0 : vector<1x16xf32>, vector<1x16xf32>, vector<1x16xf32>, vector<1x16xf32>, vector<1x16xf32>, vector<1x16xf32>, vector<1x16xf32>, vector<1x16xf32>, vector<1x16xf32>, vector<1x16xf32>, vector<1x16xf32>, vector<1x16xf32>, vector<1x16xf32>, vector<1x16xf32>, vector<1x16xf32>, vector<1x16xf32> -> vector<16x16xf32>
    %172 = tpu.concatenate %168, %169, %170 in 0 : vector<1x16xf32>, vector<1x16xf32>, vector<1x16xf32> -> vector<3x16xf32>
    %173 = tpu.concatenate %171, %172 in 0 : vector<16x16xf32>, vector<3x16xf32> -> vector<19x16xf32>
    %174 = vector.extract_strided_slice %134 {offsets = [9, 0], sizes = [9, 48], strides = [1, 1]} : vector<18x48xf32> to vector<9x48xf32>
    %175 = vector.extract_strided_slice %174 {offsets = [0, 0], sizes = [1, 16], strides = [1, 1]} : vector<9x48xf32> to vector<1x16xf32>
    %176 = vector.extract_strided_slice %174 {offsets = [0, 16], sizes = [1, 16], strides = [1, 1]} : vector<9x48xf32> to vector<1x16xf32>
    %177 = vector.extract_strided_slice %174 {offsets = [1, 0], sizes = [1, 16], strides = [1, 1]} : vector<9x48xf32> to vector<1x16xf32>
    %178 = vector.extract_strided_slice %174 {offsets = [0, 32], sizes = [1, 16], strides = [1, 1]} : vector<9x48xf32> to vector<1x16xf32>
    %179 = arith.addf %177, %178 : vector<1x16xf32>
    %180 = vector.extract_strided_slice %174 {offsets = [1, 16], sizes = [1, 16], strides = [1, 1]} : vector<9x48xf32> to vector<1x16xf32>
    %181 = vector.extract_strided_slice %174 {offsets = [2, 0], sizes = [1, 16], strides = [1, 1]} : vector<9x48xf32> to vector<1x16xf32>
    %182 = vector.extract_strided_slice %174 {offsets = [1, 32], sizes = [1, 16], strides = [1, 1]} : vector<9x48xf32> to vector<1x16xf32>
    %183 = arith.addf %181, %182 : vector<1x16xf32>
    %184 = vector.extract_strided_slice %174 {offsets = [2, 16], sizes = [1, 16], strides = [1, 1]} : vector<9x48xf32> to vector<1x16xf32>
    %185 = vector.extract_strided_slice %174 {offsets = [3, 0], sizes = [1, 16], strides = [1, 1]} : vector<9x48xf32> to vector<1x16xf32>
    %186 = vector.extract_strided_slice %174 {offsets = [2, 32], sizes = [1, 16], strides = [1, 1]} : vector<9x48xf32> to vector<1x16xf32>
    %187 = arith.addf %185, %186 : vector<1x16xf32>
    %188 = vector.extract_strided_slice %174 {offsets = [3, 16], sizes = [1, 16], strides = [1, 1]} : vector<9x48xf32> to vector<1x16xf32>
    %189 = vector.extract_strided_slice %174 {offsets = [4, 0], sizes = [1, 16], strides = [1, 1]} : vector<9x48xf32> to vector<1x16xf32>
    %190 = vector.extract_strided_slice %174 {offsets = [3, 32], sizes = [1, 16], strides = [1, 1]} : vector<9x48xf32> to vector<1x16xf32>
    %191 = arith.addf %189, %190 : vector<1x16xf32>
    %192 = vector.extract_strided_slice %174 {offsets = [4, 16], sizes = [1, 16], strides = [1, 1]} : vector<9x48xf32> to vector<1x16xf32>
    %193 = vector.extract_strided_slice %174 {offsets = [5, 0], sizes = [1, 16], strides = [1, 1]} : vector<9x48xf32> to vector<1x16xf32>
    %194 = vector.extract_strided_slice %174 {offsets = [4, 32], sizes = [1, 16], strides = [1, 1]} : vector<9x48xf32> to vector<1x16xf32>
    %195 = arith.addf %193, %194 : vector<1x16xf32>
    %196 = vector.extract_strided_slice %174 {offsets = [5, 16], sizes = [1, 16], strides = [1, 1]} : vector<9x48xf32> to vector<1x16xf32>
    %197 = vector.extract_strided_slice %174 {offsets = [6, 0], sizes = [1, 16], strides = [1, 1]} : vector<9x48xf32> to vector<1x16xf32>
    %198 = vector.extract_strided_slice %174 {offsets = [5, 32], sizes = [1, 16], strides = [1, 1]} : vector<9x48xf32> to vector<1x16xf32>
    %199 = arith.addf %197, %198 : vector<1x16xf32>
    %200 = vector.extract_strided_slice %174 {offsets = [6, 16], sizes = [1, 16], strides = [1, 1]} : vector<9x48xf32> to vector<1x16xf32>
    %201 = vector.extract_strided_slice %174 {offsets = [7, 0], sizes = [1, 16], strides = [1, 1]} : vector<9x48xf32> to vector<1x16xf32>
    %202 = vector.extract_strided_slice %174 {offsets = [6, 32], sizes = [1, 16], strides = [1, 1]} : vector<9x48xf32> to vector<1x16xf32>
    %203 = arith.addf %201, %202 : vector<1x16xf32>
    %204 = vector.extract_strided_slice %174 {offsets = [7, 16], sizes = [1, 16], strides = [1, 1]} : vector<9x48xf32> to vector<1x16xf32>
    %205 = vector.extract_strided_slice %174 {offsets = [8, 0], sizes = [1, 16], strides = [1, 1]} : vector<9x48xf32> to vector<1x16xf32>
    %206 = vector.extract_strided_slice %174 {offsets = [7, 32], sizes = [1, 16], strides = [1, 1]} : vector<9x48xf32> to vector<1x16xf32>
    %207 = arith.addf %205, %206 : vector<1x16xf32>
    %208 = vector.extract_strided_slice %174 {offsets = [8, 16], sizes = [1, 16], strides = [1, 1]} : vector<9x48xf32> to vector<1x16xf32>
    %209 = vector.extract_strided_slice %174 {offsets = [8, 32], sizes = [1, 16], strides = [1, 1]} : vector<9x48xf32> to vector<1x16xf32>
    %210 = tpu.concatenate %175, %176, %179, %180, %183, %184, %187, %188, %191, %192, %195, %196, %199, %200, %203, %204 in 0 : vector<1x16xf32>, vector<1x16xf32>, vector<1x16xf32>, vector<1x16xf32>, vector<1x16xf32>, vector<1x16xf32>, vector<1x16xf32>, vector<1x16xf32>, vector<1x16xf32>, vector<1x16xf32>, vector<1x16xf32>, vector<1x16xf32>, vector<1x16xf32>, vector<1x16xf32>, vector<1x16xf32>, vector<1x16xf32> -> vector<16x16xf32>
    %211 = tpu.concatenate %207, %208, %209 in 0 : vector<1x16xf32>, vector<1x16xf32>, vector<1x16xf32> -> vector<3x16xf32>
    %212 = tpu.concatenate %210, %211 in 0 : vector<16x16xf32>, vector<3x16xf32> -> vector<19x16xf32>
    %213 = tpu.concatenate %173, %212 in 0 : vector<19x16xf32>, vector<19x16xf32> -> vector<38x16xf32>
    %214 = vector.broadcast %13 : vector<1x1xf32> to vector<38x16xf32>
    %215 = arith.addf %213, %214 : vector<38x16xf32>
    %cst_20 = arith.constant dense<0.000000e+00> : vector<38x128xf32>
    %216 = tpu.matmul %215, %6, %cst_20 {dimension_numbers = #tpu.dot_dimension_numbers<[1], [0], [0], [1], [0, 0, 1, 1], [], []>} : vector<38x16xf32>, vector<16x128xf32>, vector<38x128xf32> -> vector<38x128xf32>
    %c0_21 = arith.constant 0 : index
    %c0_22 = arith.constant 0 : index
    %217 = vector.load %arg2[%c0_21, %c0_22] : memref<38x128xf32, #tpu.memory_space<vmem>>, vector<38x128xf32>
    tpu.vector_store %arg2[%c0_21, %c0_22], %216 {strides = array<i32>} : memref<38x128xf32, #tpu.memory_space<vmem>>, vector<38x128xf32>,
    return
  }
}

</mosaic_0001>

<llo_original>
// kernel: tpu_custom_call.1
$region0: #{tpu_custom_call.1}
  #allocation0 [shape = 'u32[]', space=smem, size = 0x4, offset = 0x4, fixed_abs, tag = 'smem constant byte address 0x4 - core index']
  #allocation1 [shape = 'u32[144,128]{1,0:T(1,128)}', space=vmem, size = 0x12000, scoped, tag = 'internal scratch']
  %s0 = inlined_call_operand.vmem [shape: f32[38,16], index: 0, kind: input, shape index: {}]
  %s1 = inlined_call_operand.hbm [shape: f32[189,128], index: 1, kind: input, shape index: {}]
  %s2 = inlined_call_operand.hbm [shape: f32[38,128], index: 2, kind: output, shape index: {}]
  %s3 = sld [smem:[#allocation0]]
  $region22: #{tpu_custom_call.1} parent=0
    _
  %s5 = ssub.s32 1, %s3
  %s6 = scalar_select 0, %s5, %s3
  $region1: #{tpu_custom_call.1} parent=0
    #allocation2 [shape = 'u8[98304]{0}', space=vmem, size = 0x18000, scoped, tag = 'input window, operand 1, single buffered']
    #allocation3 [shape = 's32[1]{0}', space=sflag, size = 0x4, scoped, tag = 'scoped memory for tpu_custom_call.1']
    #allocation4 [shape = 's32[1]{0}', space=sflag, size = 0x4, scoped, tag = 'scoped memory for tpu_custom_call.1']
    #allocation5 [shape = 'u8[20480]{0}', space=vmem, size = 0x5000, scoped, tag = 'output window, operand 0, single buffered']
    %7 = vsyncpa [#allocation3], 0
    %8 = vsyncpa [#allocation4], 0
    // Predicated region
    $region2: #{tpu_custom_call.1} parent=1 // pred_check
      _
    $region3: #{tpu_custom_call.1} parent=1 // pred_check_branch
      %10 = sbr.rel (0) target = $region5
    $region4: #{tpu_custom_call.1} parent=1 // pred_region
      _
    $region5: #{tpu_custom_call.1} parent=1 // pred_fallthru
      _
    // Predicated region
    $region6: #{tpu_custom_call.1} parent=1 // pred_check
      _
    $region7: #{tpu_custom_call.1} parent=1 // pred_check_branch
      %12 = sbr.rel (0) target = $region9
    $region8: #{tpu_custom_call.1} parent=1 // pred_region
      %s14 = ssub.s32 3072, 3072
      %15 = vsyncadd [#allocation3], %s14
      %s16 = sshll.u32 [#allocation2], 4
      %s17 = int_to_ptr.vmem [resolvable:$true] %s16
      %22 = dma.hbm_to_vmem [thread:$0]  %s1, 3072, %s17, [#allocation3], 128, 128, 8
    $region9: #{tpu_custom_call.1} parent=1 // pred_fallthru
      _
    // Predicated region
    $region10: #{tpu_custom_call.1} parent=1 // pred_check
      _
    $region11: #{tpu_custom_call.1} parent=1 // pred_check_branch
      %24 = sbr.rel (0) target = $region13
    $region12: #{tpu_custom_call.1} parent=1 // pred_region
      %25 = dma.done [#allocation3], 3072
    $region13: #{tpu_custom_call.1} parent=1 // pred_fallthru
      _
    %v26 = vld [vmem:[#allocation2] sm:$0xff]
    %v27 = vld [vmem:[#allocation2 + $0x8] sm:$0xff]
    %v28 = vld [vmem:[#allocation2 + $0x10] sm:$0xff]
    %v29 = vld [vmem:[#allocation2 + $0x18] sm:$0xff]
    %v30 = vld [vmem:[#allocation2 + $0x20] sm:$0xff]
    %v31 = vld [vmem:[#allocation2 + $0x28] sm:$0xff]
    %v32 = vld [vmem:[#allocation2 + $0x30] sm:$0xff]
    %v33 = vld [vmem:[#allocation2 + $0x38] sm:$0xff]
    %v34 = vld [vmem:[#allocation2 + $0x40] sm:$0xff]
    %v35 = vld [vmem:[#allocation2 + $0x48] sm:$0xff]
    %v36 = vld [vmem:[#allocation2 + $0x50] sm:$0xff]
    %v37 = vld [vmem:[#allocation2 + $0x58] sm:$0xff]
    %v38 = vld [vmem:[#allocation2 + $0x60] sm:$0xff]
    %v39 = vld [vmem:[#allocation2 + $0x68] sm:$0xff]
    %v40 = vld [vmem:[#allocation2 + $0x70] sm:$0xff]
    %v41 = vld [vmem:[#allocation2 + $0x78] sm:$0xff]
    %v42 = vld [vmem:[#allocation2 + $0x80] sm:$0xff]
    %v43 = vld [vmem:[#allocation2 + $0x88] sm:$0xff]
    %v44 = vld [vmem:[#allocation2 + $0x90] sm:$0xf]
    %v45 = vld [vmem:[#allocation2 + $0x94] sm:$0xff]
    %v46 = vld [vmem:[#allocation2 + $0x9c] sm:$0xff]
    %v47 = vld [vmem:[#allocation2 + $0xa4] sm:$0xff]
    %v48 = vld [vmem:[#allocation2 + $0xac] sm:$0xff]
    %v49 = vld [vmem:[#allocation2 + $0xb4] sm:$0xff]
    %v50 = vld [vmem:[#allocation2 + $0xbc] sm:$0x1]
    %v51 = vld [vmem:[%s0] ss:$2 sm:$0xff]
    %s52 = scalar_lea.vmem %s0, 16
    %v53 = vld [vmem:[%s52] ss:$2 sm:$0x1]
    %s54 = scalar_lea.vmem %s0, 1
    %v55 = vld [vmem:[%s54] ss:$2 sm:$0xff]
    %s56 = scalar_lea.vmem %s0, 17
    %v57 = vld [vmem:[%s56] ss:$2 sm:$0x1]
    %s58 = scalar_lea.vmem %s0, 2
    %v59 = vld [vmem:[%s58] ss:$2 sm:$0xff]
    %s60 = scalar_lea.vmem %s0, 18
    %v61 = vld [vmem:[%s60] ss:$2 sm:$0x1]
    %64 = vrot.lane.b32.xlu0 %v55, 16
    %v65 = vpop.permute.xlu0 %64
    %66 = vrot.lane.b32.xlu0 %v57, 16
    %v67 = vpop.permute.xlu0 %66
    %72 = vrot.lane.b32.xlu0 %v59, 32
    %v73 = vpop.permute.xlu0 %72
    %74 = vrot.lane.b32.xlu0 %v61, 32
    %v75 = vpop.permute.xlu0 %74
    %vm78 = vcmask 130048
    %v79 = vsel %vm78, %v51, %v65
    %v80 = vsel %vm78, %v53, %v67
    %vm81 = vcmask 261120
    %v82 = vsel %vm81, %v79, %v73
    %v83 = vsel %vm81, %v80, %v75
    %s84 = scalar_lea.vmem %s0, 19
    %v85 = vld [vmem:[%s84] ss:$2 sm:$0xff]
    %s86 = scalar_lea.vmem %s0, 35
    %v87 = vld [vmem:[%s86] ss:$2 sm:$0x1]
    %s88 = scalar_lea.vmem %s0, 20
    %v89 = vld [vmem:[%s88] ss:$2 sm:$0xff]
    %s90 = scalar_lea.vmem %s0, 36
    %v91 = vld [vmem:[%s90] ss:$2 sm:$0x1]
    %s92 = scalar_lea.vmem %s0, 21
    %v93 = vld [vmem:[%s92] ss:$2 sm:$0xff]
    %s94 = scalar_lea.vmem %s0, 37
    %v95 = vld [vmem:[%s94] ss:$2 sm:$0x1]
    %98 = vrot.lane.b32.xlu0 %v89, 16
    %v99 = vpop.permute.xlu0 %98
    %100 = vrot.lane.b32.xlu0 %v91, 16
    %v101 = vpop.permute.xlu0 %100
    %106 = vrot.lane.b32.xlu0 %v93, 32
    %v107 = vpop.permute.xlu0 %106
    %108 = vrot.lane.b32.xlu0 %v95, 32
    %v109 = vpop.permute.xlu0 %108
    %v112 = vsel %vm78, %v85, %v99
    %v113 = vsel %vm78, %v87, %v101
    %v114 = vsel %vm81, %v112, %v107
    %v115 = vsel %vm81, %v113, %v109
    %vm118 = vcmask 1040384
    %v119 = vrot.slane %v114, 7
    %v120 = vrot.slane %v115, 7
    %v121 = vsel %vm118, %v119, %v120
    %v123 = vsel %vm118, %v83, %v119
    %v124 = vlaneseq
    %v125 = vshrl.u32 %v124, 7
    %v126 = vsub.s32 0, %v125
    %v127 = vrot.slane %v50, %v126
    %vm128 = vcmask 392192
    %v130 = vsel %vm128, %v82, 0
    %v133 = vsel %vm128, %v123, 0
    %v135 = vsel %vm128, %v121, 0
    %137 = vmatprep.subr.mxu0 0.0
    %138 = vmatpush1.msra.mxu0 %v26
    %139 = vmatprep.subr.mxu0 0.0
    %140 = vmatpush1.msra.mxu0 %v27
    %141 = vmatprep.subr.mxu0 0.0
    %142 = vmatpush1.msra.mxu0 %v28
    %143 = vmatprep.subr.mxu0 0.0
    %144 = vmatpush1.msra.mxu0 %v29
    %145 = vmatprep.subr.mxu0 0.0
    %146 = vmatpush1.msra.mxu0 %v30
    %147 = vmatprep.subr.mxu0 0.0
    %148 = vmatpush1.msra.mxu0 %v31
    %149 = vmatprep.subr.mxu0 0.0
    %150 = vmatpush1.msra.mxu0 0.0
    %151 = vmatprep.subr.mxu0 0.0
    %152 = vmatpush1.msra.mxu0 0.0
    %153 = vmatprep.subr.mxu0 0.0
    %154 = vmatpush1.msra.mxu0 0.0
    %155 = vmatprep.subr.mxu0 0.0
    %156 = vmatpush1.msra.mxu0 0.0
    %157 = vmatprep.subr.mxu0 0.0
    %158 = vmatpush1.msra.mxu0 0.0
    %159 = vmatprep.subr.mxu0 0.0
    %160 = vmatpush1.msra.mxu0 0.0
    %161 = vmatprep.subr.mxu0 0.0
    %162 = vmatpush1.msra.mxu0 0.0
    %163 = vmatprep.subr.mxu0 0.0
    %164 = vmatpush1.msra.mxu0 0.0
    %165 = vmatprep.subr.mxu0 0.0
    %166 = vmatpush1.msra.mxu0 0.0
    %167 = vmatprep.subr.mxu0 0.0
    %168 = vmatpush1.msra.mxu0 0.0
    %169 = vmatprep.subr.mxu0 0.0
    %170 = vmatpush1.msra.mxu0 0.0
    %171 = vmatprep.subr.mxu0 0.0
    %172 = vmatpush1.msra.mxu0 0.0
    %173 = vmatprep.subr.mxu0 0.0
    %174 = vmatpush1.msra.mxu0 0.0
    %175 = vmatprep.subr.mxu0 0.0
    %176 = vmatpush1.msra.mxu0 0.0
    %177 = vmatprep.subr.mxu0 0.0
    %178 = vmatpush1.msra.mxu0 0.0
    %179 = vmatprep.subr.mxu0 0.0
    %180 = vmatpush1.msra.mxu0 0.0
    %181 = vmatprep.subr.mxu0 0.0
    %182 = vmatpush1.msra.mxu0 0.0
    %183 = vmatprep.subr.mxu0 0.0
    %184 = vmatpush1.msra.mxu0 0.0
    %185 = vmatprep.subr.mxu0 0.0
    %186 = vmatpush1.msra.mxu0 0.0
    %187 = vmatprep.subr.mxu0 0.0
    %188 = vmatpush1.msra.mxu0 0.0
    %189 = vmatprep.subr.mxu0 0.0
    %190 = vmatpush1.msra.mxu0 0.0
    %191 = vmatprep.subr.mxu0 0.0
    %192 = vmatpush1.msra.mxu0 0.0
    %193 = vmatprep.subr.mxu0 0.0
    %194 = vmatpush1.msra.mxu0 0.0
    %195 = vmatprep.subr.mxu0 0.0
    %196 = vmatpush1.msra.mxu0 0.0
    %197 = vmatprep.subr.mxu0 0.0
    %198 = vmatpush1.msra.mxu0 0.0
    %199 = vmatprep.subr.mxu0 0.0
    %200 = vmatpush1.msra.mxu0 0.0
    %201 = vmatprep.mubr.f32.mxu0 0.0
    %202 = vmatmul.mubr.f32.gmra.mrb[0].mxu0 %v130
    %v203 = vpop.f32.mrb[0].mxu0
    %v204 = vadd.f32 %v127, %v203
    %v205 = vpop.f32.mrb[0].mxu0
    %206 = vmatprep.mubr.f32.mxu0 0.0
    %207 = vmatmul.mubr.f32.gmra.mrb[0].mxu0 %v133
    %v208 = vpop.f32.mrb[0].mxu0
    %v209 = vadd.f32 %v127, %v208
    %v210 = vpop.f32.mrb[0].mxu0
    %211 = vmatprep.mubr.f32.mxu0 0.0
    %212 = vmatmul.mubr.f32.gmra.mrb[0].mxu0 %v135
    %v213 = vpop.f32.mrb[0].mxu0
    %v214 = vadd.f32 %v127, %v213
    %v215 = vpop.f32.mrb[0].mxu0
    %216 = vdwg.mxu0
    %v218 = vrot.slane %v204, 1
    %219 = vrot.lane.b32.xlu0 %v218, 8
    %v220 = vpop.permute.xlu0 %219
    %v222 = vrot.slane %v204, 2
    %223 = vrot.lane.b32.xlu0 %v222, 16
    %v224 = vpop.permute.xlu0 %223
    %vm226 = vcmask 64512
    %v227 = vsel %vm226, %v204, %v220
    %v228 = vsel %vm78, %v227, %v224
    %v230 = vrot.slane %v209, 2
    %231 = vrot.lane.b32.xlu0 %v230, 16
    %v232 = vpop.permute.xlu0 %231
    %v234 = vsel %vm78, %v227, %v232
    %v236 = vrot.slane %v228, 1
    %v238 = vrot.slane %v228, 2
    %v241 = vrot.slane %v234, 3
    %v243 = vsel %vm118, %v228, %v236
    %vm244 = vcmask 1041408
    %v245 = vsel %vm244, %v243, %v238
    %vm246 = vcmask 1042432
    %v247 = vsel %vm246, %v245, %v241
    %v248 = vrot.slane %v209, 1
    %249 = vrot.lane.b32.xlu0 %v248, 8
    %v250 = vpop.permute.xlu0 %249
    %v252 = vsel %vm226, %v209, %v250
    %v253 = vsel %vm78, %v252, %v232
    %v255 = vrot.slane %v214, 1
    %256 = vrot.lane.b32.xlu0 %v255, 8
    %v257 = vpop.permute.xlu0 %256
    %v259 = vrot.slane %v214, 2
    %260 = vrot.lane.b32.xlu0 %v259, 16
    %v261 = vpop.permute.xlu0 %260
    %v263 = vsel %vm226, %v209, %v257
    %v264 = vsel %vm78, %v263, %v261
    %v266 = vrot.slane %v253, 1
    %v268 = vrot.slane %v253, 2
    %v270 = vrot.slane %v253, 3
    %v273 = vrot.slane %v264, 4
    %v275 = vsel %vm118, %v266, %v268
    %v276 = vsel %vm244, %v275, %v270
    %v277 = vsel %vm246, %v276, %v273
    %v279 = vrot.slane %v277, 4
    %vm281 = vcmask 1043456
    %v282 = vsel %vm281, %v247, %v279
    %284 = vrot.lane.b32.xlu0 %v127, 120
    %v285 = vpop.permute.xlu0 %284
    %vm287 = vcmask 195584
    %v289 = vsel %vm287, %v282, 0
    %291 = vmatprep.subr.mxu0 0.0
    %292 = vmatpush1.msra.mxu0 %v32
    %293 = vmatprep.subr.mxu0 0.0
    %294 = vmatpush1.msra.mxu0 %v33
    %295 = vmatprep.subr.mxu0 0.0
    %296 = vmatpush1.msra.mxu0 %v34
    %297 = vmatprep.subr.mxu0 0.0
    %298 = vmatpush1.msra.mxu0 0.0
    %299 = vmatprep.subr.mxu0 0.0
    %300 = vmatpush1.msra.mxu0 0.0
    %301 = vmatprep.subr.mxu0 0.0
    %302 = vmatpush1.msra.mxu0 0.0
    %303 = vmatprep.subr.mxu0 0.0
    %304 = vmatpush1.msra.mxu0 0.0
    %305 = vmatprep.subr.mxu0 0.0
    %306 = vmatpush1.msra.mxu0 0.0
    %307 = vmatprep.subr.mxu0 0.0
    %308 = vmatpush1.msra.mxu0 0.0
    %309 = vmatprep.subr.mxu0 0.0
    %310 = vmatpush1.msra.mxu0 0.0
    %311 = vmatprep.subr.mxu0 0.0
    %312 = vmatpush1.msra.mxu0 0.0
    %313 = vmatprep.subr.mxu0 0.0
    %314 = vmatpush1.msra.mxu0 0.0
    %315 = vmatprep.subr.mxu0 0.0
    %316 = vmatpush1.msra.mxu0 0.0
    %317 = vmatprep.subr.mxu0 0.0
    %318 = vmatpush1.msra.mxu0 0.0
    %319 = vmatprep.subr.mxu0 0.0
    %320 = vmatpush1.msra.mxu0 0.0
    %321 = vmatprep.subr.mxu0 0.0
    %322 = vmatpush1.msra.mxu0 0.0
    %323 = vmatprep.subr.mxu0 0.0
    %324 = vmatpush1.msra.mxu0 0.0
    %325 = vmatprep.subr.mxu0 0.0
    %326 = vmatpush1.msra.mxu0 0.0
    %327 = vmatprep.subr.mxu0 0.0
    %328 = vmatpush1.msra.mxu0 0.0
    %329 = vmatprep.subr.mxu0 0.0
    %330 = vmatpush1.msra.mxu0 0.0
    %331 = vmatprep.subr.mxu0 0.0
    %332 = vmatpush1.msra.mxu0 0.0
    %333 = vmatprep.subr.mxu0 0.0
    %334 = vmatpush1.msra.mxu0 0.0
    %335 = vmatprep.subr.mxu0 0.0
    %336 = vmatpush1.msra.mxu0 0.0
    %337 = vmatprep.subr.mxu0 0.0
    %338 = vmatpush1.msra.mxu0 0.0
    %339 = vmatprep.subr.mxu0 0.0
    %340 = vmatpush1.msra.mxu0 0.0
    %341 = vmatprep.subr.mxu0 0.0
    %342 = vmatpush1.msra.mxu0 0.0
    %343 = vmatprep.subr.mxu0 0.0
    %344 = vmatpush1.msra.mxu0 0.0
    %345 = vmatprep.subr.mxu0 0.0
    %346 = vmatpush1.msra.mxu0 0.0
    %347 = vmatprep.subr.mxu0 0.0
    %348 = vmatpush1.msra.mxu0 0.0
    %349 = vmatprep.subr.mxu0 0.0
    %350 = vmatpush1.msra.mxu0 0.0
    %351 = vmatprep.subr.mxu0 0.0
    %352 = vmatpush1.msra.mxu0 0.0
    %353 = vmatprep.subr.mxu0 0.0
    %354 = vmatpush1.msra.mxu0 0.0
    %355 = vmatprep.mubr.f32.mxu0 0.0
    %356 = vmatmul.mubr.f32.gmra.mrb[0].mxu0 %v289
    %v357 = vpop.f32.mrb[0].mxu0
    %v358 = vadd.f32 %v285, %v357
    %v359 = vpop.f32.mrb[0].mxu0
    %360 = vdwg.mxu0
    %v362 = vrot.slane %v358, 1
    %363 = vrot.lane.b32.xlu0 %v362, 16
    %v364 = vpop.permute.xlu0 %363
    %v366 = vrot.slane %v358, 2
    %367 = vrot.lane.b32.xlu0 %v366, 32
    %v368 = vpop.permute.xlu0 %367
    %v370 = vrot.slane %v358, 3
    %371 = vrot.lane.b32.xlu0 %v370, 48
    %v372 = vpop.permute.xlu0 %371
    %v374 = vsel %vm78, %v358, %v364
    %v375 = vsel %vm81, %v374, %v368
    %v376 = vsel %vm128, %v375, %v372
    %v378 = vrot.slane %v376, 3
    %v380 = vsel %vm118, %v376, %v378
    %381 = vrot.lane.b32.xlu0 %v127, 104
    %v382 = vpop.permute.xlu0 %381
    %vm384 = vcmask 523264
    %v386 = vsel %vm384, %v380, 0
    %388 = vmatprep.subr.mxu0 0.0
    %389 = vmatpush1.msra.mxu0 %v35
    %390 = vmatprep.subr.mxu0 0.0
    %391 = vmatpush1.msra.mxu0 %v36
    %392 = vmatprep.subr.mxu0 0.0
    %393 = vmatpush1.msra.mxu0 %v37
    %394 = vmatprep.subr.mxu0 0.0
    %395 = vmatpush1.msra.mxu0 %v38
    %396 = vmatprep.subr.mxu0 0.0
    %397 = vmatpush1.msra.mxu0 %v39
    %398 = vmatprep.subr.mxu0 0.0
    %399 = vmatpush1.msra.mxu0 %v40
    %400 = vmatprep.subr.mxu0 0.0
    %401 = vmatpush1.msra.mxu0 %v41
    %402 = vmatprep.subr.mxu0 0.0
    %403 = vmatpush1.msra.mxu0 %v42
    %404 = vmatprep.subr.mxu0 0.0
    %405 = vmatpush1.msra.mxu0 0.0
    %406 = vmatprep.subr.mxu0 0.0
    %407 = vmatpush1.msra.mxu0 0.0
    %408 = vmatprep.subr.mxu0 0.0
    %409 = vmatpush1.msra.mxu0 0.0
    %410 = vmatprep.subr.mxu0 0.0
    %411 = vmatpush1.msra.mxu0 0.0
    %412 = vmatprep.subr.mxu0 0.0
    %413 = vmatpush1.msra.mxu0 0.0
    %414 = vmatprep.subr.mxu0 0.0
    %415 = vmatpush1.msra.mxu0 0.0
    %416 = vmatprep.subr.mxu0 0.0
    %417 = vmatpush1.msra.mxu0 0.0
    %418 = vmatprep.subr.mxu0 0.0
    %419 = vmatpush1.msra.mxu0 0.0
    %420 = vmatprep.subr.mxu0 0.0
    %421 = vmatpush1.msra.mxu0 0.0
    %422 = vmatprep.subr.mxu0 0.0
    %423 = vmatpush1.msra.mxu0 0.0
    %424 = vmatprep.subr.mxu0 0.0
    %425 = vmatpush1.msra.mxu0 0.0
    %426 = vmatprep.subr.mxu0 0.0
    %427 = vmatpush1.msra.mxu0 0.0
    %428 = vmatprep.subr.mxu0 0.0
    %429 = vmatpush1.msra.mxu0 0.0
    %430 = vmatprep.subr.mxu0 0.0
    %431 = vmatpush1.msra.mxu0 0.0
    %432 = vmatprep.subr.mxu0 0.0
    %433 = vmatpush1.msra.mxu0 0.0
    %434 = vmatprep.subr.mxu0 0.0
    %435 = vmatpush1.msra.mxu0 0.0
    %436 = vmatprep.subr.mxu0 0.0
    %437 = vmatpush1.msra.mxu0 0.0
    %438 = vmatprep.subr.mxu0 0.0
    %439 = vmatpush1.msra.mxu0 0.0
    %440 = vmatprep.subr.mxu0 0.0
    %441 = vmatpush1.msra.mxu0 0.0
    %442 = vmatprep.subr.mxu0 0.0
    %443 = vmatpush1.msra.mxu0 0.0
    %444 = vmatprep.subr.mxu0 0.0
    %445 = vmatpush1.msra.mxu0 0.0
    %446 = vmatprep.subr.mxu0 0.0
    %447 = vmatpush1.msra.mxu0 0.0
    %448 = vmatprep.subr.mxu0 0.0
    %449 = vmatpush1.msra.mxu0 0.0
    %450 = vmatprep.subr.mxu0 0.0
    %451 = vmatpush1.msra.mxu0 0.0
    %452 = vmatprep.mubr.f32.mxu0 0.0
    %453 = vmatmul.mubr.f32.gmra.mrb[0].mxu0 %v386
    %v454 = vpop.f32.mrb[0].mxu0
    %v455 = vadd.f32 %v382, %v454
    %v456 = vpop.f32.mrb[0].mxu0
    %457 = vdwg.mxu0
    %459 = vrot.lane.b32.xlu0 %v50, 92
    %v460 = vpop.permute.xlu0 %459
    %s461 = vtos %v460
    %v462 = vstv %s461
    %vm464 = vcmask 97280
    %v466 = vsel %vm464, %v455, 0
    %v469 = vsel %vm281, %v44, 0
    %471 = vmatprep.subr.mxu0 0.0
    %472 = vmatpush1.msra.mxu0 %v43
    %473 = vmatprep.subr.mxu0 0.0
    %474 = vmatpush1.msra.mxu0 %v469
    %475 = vmatprep.subr.mxu0 0.0
    %476 = vmatpush1.msra.mxu0 0.0
    %477 = vmatprep.subr.mxu0 0.0
    %478 = vmatpush1.msra.mxu0 0.0
    %479 = vmatprep.subr.mxu0 0.0
    %480 = vmatpush1.msra.mxu0 0.0
    %481 = vmatprep.subr.mxu0 0.0
    %482 = vmatpush1.msra.mxu0 0.0
    %483 = vmatprep.subr.mxu0 0.0
    %484 = vmatpush1.msra.mxu0 0.0
    %485 = vmatprep.subr.mxu0 0.0
    %486 = vmatpush1.msra.mxu0 0.0
    %487 = vmatprep.subr.mxu0 0.0
    %488 = vmatpush1.msra.mxu0 0.0
    %489 = vmatprep.subr.mxu0 0.0
    %490 = vmatpush1.msra.mxu0 0.0
    %491 = vmatprep.subr.mxu0 0.0
    %492 = vmatpush1.msra.mxu0 0.0
    %493 = vmatprep.subr.mxu0 0.0
    %494 = vmatpush1.msra.mxu0 0.0
    %495 = vmatprep.subr.mxu0 0.0
    %496 = vmatpush1.msra.mxu0 0.0
    %497 = vmatprep.subr.mxu0 0.0
    %498 = vmatpush1.msra.mxu0 0.0
    %499 = vmatprep.subr.mxu0 0.0
    %500 = vmatpush1.msra.mxu0 0.0
    %501 = vmatprep.subr.mxu0 0.0
    %502 = vmatpush1.msra.mxu0 0.0
    %503 = vmatprep.subr.mxu0 0.0
    %504 = vmatpush1.msra.mxu0 0.0
    %505 = vmatprep.subr.mxu0 0.0
    %506 = vmatpush1.msra.mxu0 0.0
    %507 = vmatprep.subr.mxu0 0.0
    %508 = vmatpush1.msra.mxu0 0.0
    %509 = vmatprep.subr.mxu0 0.0
    %510 = vmatpush1.msra.mxu0 0.0
    %511 = vmatprep.subr.mxu0 0.0
    %512 = vmatpush1.msra.mxu0 0.0
    %513 = vmatprep.subr.mxu0 0.0
    %514 = vmatpush1.msra.mxu0 0.0
    %515 = vmatprep.subr.mxu0 0.0
    %516 = vmatpush1.msra.mxu0 0.0
    %517 = vmatprep.subr.mxu0 0.0
    %518 = vmatpush1.msra.mxu0 0.0
    %519 = vmatprep.subr.mxu0 0.0
    %520 = vmatpush1.msra.mxu0 0.0
    %521 = vmatprep.subr.mxu0 0.0
    %522 = vmatpush1.msra.mxu0 0.0
    %523 = vmatprep.subr.mxu0 0.0
    %524 = vmatpush1.msra.mxu0 0.0
    %525 = vmatprep.subr.mxu0 0.0
    %526 = vmatpush1.msra.mxu0 0.0
    %527 = vmatprep.subr.mxu0 0.0
    %528 = vmatpush1.msra.mxu0 0.0
    %529 = vmatprep.subr.mxu0 0.0
    %530 = vmatpush1.msra.mxu0 0.0
    %531 = vmatprep.subr.mxu0 0.0
    %532 = vmatpush1.msra.mxu0 0.0
    %533 = vmatprep.subr.mxu0 0.0
    %534 = vmatpush1.msra.mxu0 0.0
    %535 = vmatprep.mubr.f32.mxu0 0.0
    %536 = vmatmul.mubr.f32.gmra.mrb[0].mxu0 %v466
    %v537 = vpop.f32.mrb[0].mxu0
    %v538 = vadd.f32 %v462, %v537
    %v539 = vpop.f32.mrb[0].mxu0
    %540 = vdwg.mxu0
    %v542 = vrot.slane %v538, 7
    %543 = vrot.lane.b32.xlu0 %v542, 112
    %v544 = vpop.permute.xlu0 %543
    %v546 = vrot.slane %v538, 6
    %547 = vrot.lane.b32.xlu0 %v546, 96
    %v548 = vpop.permute.xlu0 %547
    %v550 = vrot.slane %v538, 5
    %551 = vrot.lane.b32.xlu0 %v550, 80
    %v552 = vpop.permute.xlu0 %551
    %v554 = vsel %vm118, %v538, %v544
    %v555 = vsel %vm244, %v554, %v548
    %v556 = vsel %vm246, %v555, %v552
    %v557 = vrot.slane %v538, 1
    %559 = vrot.lane.b32.xlu0 %v538, 112
    %v560 = vpop.permute.xlu0 %559
    %562 = vrot.lane.b32.xlu0 %v542, 96
    %v563 = vpop.permute.xlu0 %562
    %565 = vrot.lane.b32.xlu0 %v546, 80
    %v566 = vpop.permute.xlu0 %565
    %v568 = vsel %vm118, %v557, %v560
    %v569 = vsel %vm244, %v568, %v563
    %v570 = vsel %vm246, %v569, %v566
    %v572 = vrot.slane %v570, 4
    %v574 = vsel %vm281, %v556, %v572
    %v576 = vsel %vm78, %v574, 0
    %578 = vmatprep.subr.mxu0 0.0
    %579 = vmatpush1.msra.mxu0 %v45
    %580 = vmatprep.subr.mxu0 0.0
    %581 = vmatpush1.msra.mxu0 %v46
    %582 = vmatprep.subr.mxu0 0.0
    %583 = vmatpush1.msra.mxu0 0.0
    %584 = vmatprep.subr.mxu0 0.0
    %585 = vmatpush1.msra.mxu0 0.0
    %586 = vmatprep.subr.mxu0 0.0
    %587 = vmatpush1.msra.mxu0 0.0
    %588 = vmatprep.subr.mxu0 0.0
    %589 = vmatpush1.msra.mxu0 0.0
    %590 = vmatprep.subr.mxu0 0.0
    %591 = vmatpush1.msra.mxu0 0.0
    %592 = vmatprep.subr.mxu0 0.0
    %593 = vmatpush1.msra.mxu0 0.0
    %594 = vmatprep.subr.mxu0 0.0
    %595 = vmatpush1.msra.mxu0 0.0
    %596 = vmatprep.subr.mxu0 0.0
    %597 = vmatpush1.msra.mxu0 0.0
    %598 = vmatprep.subr.mxu0 0.0
    %599 = vmatpush1.msra.mxu0 0.0
    %600 = vmatprep.subr.mxu0 0.0
    %601 = vmatpush1.msra.mxu0 0.0
    %602 = vmatprep.subr.mxu0 0.0
    %603 = vmatpush1.msra.mxu0 0.0
    %604 = vmatprep.subr.mxu0 0.0
    %605 = vmatpush1.msra.mxu0 0.0
    %606 = vmatprep.subr.mxu0 0.0
    %607 = vmatpush1.msra.mxu0 0.0
    %608 = vmatprep.subr.mxu0 0.0
    %609 = vmatpush1.msra.mxu0 0.0
    %610 = vmatprep.subr.mxu0 0.0
    %611 = vmatpush1.msra.mxu0 0.0
    %612 = vmatprep.subr.mxu0 0.0
    %613 = vmatpush1.msra.mxu0 0.0
    %614 = vmatprep.subr.mxu0 0.0
    %615 = vmatpush1.msra.mxu0 0.0
    %616 = vmatprep.subr.mxu0 0.0
    %617 = vmatpush1.msra.mxu0 0.0
    %618 = vmatprep.subr.mxu0 0.0
    %619 = vmatpush1.msra.mxu0 0.0
    %620 = vmatprep.subr.mxu0 0.0
    %621 = vmatpush1.msra.mxu0 0.0
    %622 = vmatprep.subr.mxu0 0.0
    %623 = vmatpush1.msra.mxu0 0.0
    %624 = vmatprep.subr.mxu0 0.0
    %625 = vmatpush1.msra.mxu0 0.0
    %626 = vmatprep.subr.mxu0 0.0
    %627 = vmatpush1.msra.mxu0 0.0
    %628 = vmatprep.subr.mxu0 0.0
    %629 = vmatpush1.msra.mxu0 0.0
    %630 = vmatprep.subr.mxu0 0.0
    %631 = vmatpush1.msra.mxu0 0.0
    %632 = vmatprep.subr.mxu0 0.0
    %633 = vmatpush1.msra.mxu0 0.0
    %634 = vmatprep.subr.mxu0 0.0
    %635 = vmatpush1.msra.mxu0 0.0
    %636 = vmatprep.subr.mxu0 0.0
    %637 = vmatpush1.msra.mxu0 0.0
    %638 = vmatprep.subr.mxu0 0.0
    %639 = vmatpush1.msra.mxu0 0.0
    %640 = vmatprep.subr.mxu0 0.0
    %641 = vmatpush1.msra.mxu0 0.0
    %642 = vmatprep.mubr.f32.mxu0 0.0
    %643 = vmatmul.mubr.f32.gmra.mrb[0].mxu0 %v576
    %v644 = vpop.f32.mrb[0].mxu0
    %v645 = vadd.f32 0.0, %v644
    %v646 = vpop.f32.mrb[0].mxu0
    %647 = vdwg.mxu0
    %v649 = vrot.slane %v645, 7
    %650 = vrot.lane.b32.xlu0 %v649, 112
    %v651 = vpop.permute.xlu0 %650
    %v653 = vadd.f32 %v645, %v651
    %654 = vrot.lane.b32.xlu0 %v649, 120
    %v655 = vpop.permute.xlu0 %654
    %v658 = vrot.slane %v653, 7
    %v660 = vrot.slane %v645, 6
    %661 = vrot.lane.b32.xlu0 %v660, 120
    %v662 = vpop.permute.xlu0 %661
    %v664 = vrot.slane %v653, 6
    %v666 = vrot.slane %v645, 5
    %667 = vrot.lane.b32.xlu0 %v666, 120
    %v668 = vpop.permute.xlu0 %667
    %v670 = vrot.slane %v653, 5
    %v672 = vrot.slane %v645, 4
    %673 = vrot.lane.b32.xlu0 %v672, 120
    %v674 = vpop.permute.xlu0 %673
    %v676 = vrot.slane %v645, 3
    %677 = vrot.lane.b32.xlu0 %v676, 112
    %v678 = vpop.permute.xlu0 %677
    %v680 = vsel %vm118, %v645, %v655
    %v681 = vsel %vm244, %v680, %v658
    %v682 = vsel %vm246, %v681, %v662
    %v683 = vsel %vm281, %v682, %v664
    %vm684 = vcmask 1044480
    %v685 = vsel %vm684, %v683, %v668
    %vm686 = vcmask 1045504
    %v687 = vsel %vm686, %v685, %v670
    %vm688 = vcmask 1046528
    %v689 = vsel %vm688, %v687, %v674
    %691 = vrot.lane.b32.xlu0 %v676, 120
    %v692 = vpop.permute.xlu0 %691
    %v694 = vrot.slane %v653, 3
    %v696 = vrot.slane %v645, 2
    %697 = vrot.lane.b32.xlu0 %v696, 120
    %v698 = vpop.permute.xlu0 %697
    %v700 = vrot.slane %v653, 2
    %v702 = vrot.slane %v645, 1
    %703 = vrot.lane.b32.xlu0 %v702, 120
    %v704 = vpop.permute.xlu0 %703
    %v706 = vrot.slane %v653, 1
    %708 = vrot.lane.b32.xlu0 %v645, 120
    %v709 = vpop.permute.xlu0 %708
    %v711 = vsel %vm118, %v672, %v692
    %v712 = vsel %vm244, %v711, %v694
    %v713 = vsel %vm246, %v712, %v698
    %v714 = vsel %vm281, %v713, %v700
    %v715 = vsel %vm684, %v714, %v704
    %v716 = vsel %vm686, %v715, %v706
    %v717 = vsel %vm688, %v716, %v709
    %v719 = vrot.slane %v717, 7
    %v720 = vrot.slane %v651, 7
    %v721 = vsel %vm118, %v719, %v720
    %v724 = vsel %vm118, %v678, %v719
    %725 = vrot.lane.b32.xlu0 %v50, 91
    %v726 = vpop.permute.xlu0 %725
    %s727 = vtos %v726
    %v728 = vstv %s727
    %v730 = vadd.f32 %v689, %v728
    %v731 = vadd.f32 %v724, %v728
    %v732 = vadd.f32 %v721, %v728
    %v734 = vsel %vm226, %v730, 0
    %v737 = vsel %vm226, %v731, 0
    %v740 = vsel %vm226, %v732, 0
    %742 = vmatprep.subr.mxu0 0.0
    %743 = vmatpush1.msra.mxu0 %v47
    %744 = vmatprep.subr.mxu0 0.0
    %745 = vmatpush1.msra.mxu0 0.0
    %746 = vmatprep.subr.mxu0 0.0
    %747 = vmatpush1.msra.mxu0 0.0
    %748 = vmatprep.subr.mxu0 0.0
    %749 = vmatpush1.msra.mxu0 0.0
    %750 = vmatprep.subr.mxu0 0.0
    %751 = vmatpush1.msra.mxu0 0.0
    %752 = vmatprep.subr.mxu0 0.0
    %753 = vmatpush1.msra.mxu0 0.0
    %754 = vmatprep.subr.mxu0 0.0
    %755 = vmatpush1.msra.mxu0 0.0
    %756 = vmatprep.subr.mxu0 0.0
    %757 = vmatpush1.msra.mxu0 0.0
    %758 = vmatprep.subr.mxu0 0.0
    %759 = vmatpush1.msra.mxu0 0.0
    %760 = vmatprep.subr.mxu0 0.0
    %761 = vmatpush1.msra.mxu0 0.0
    %762 = vmatprep.subr.mxu0 0.0
    %763 = vmatpush1.msra.mxu0 0.0
    %764 = vmatprep.subr.mxu0 0.0
    %765 = vmatpush1.msra.mxu0 0.0
    %766 = vmatprep.subr.mxu0 0.0
    %767 = vmatpush1.msra.mxu0 0.0
    %768 = vmatprep.subr.mxu0 0.0
    %769 = vmatpush1.msra.mxu0 0.0
    %770 = vmatprep.subr.mxu0 0.0
    %771 = vmatpush1.msra.mxu0 0.0
    %772 = vmatprep.subr.mxu0 0.0
    %773 = vmatpush1.msra.mxu0 0.0
    %774 = vmatprep.subr.mxu0 0.0
    %775 = vmatpush1.msra.mxu0 0.0
    %776 = vmatprep.subr.mxu0 0.0
    %777 = vmatpush1.msra.mxu0 0.0
    %778 = vmatprep.subr.mxu0 0.0
    %779 = vmatpush1.msra.mxu0 0.0
    %780 = vmatprep.subr.mxu0 0.0
    %781 = vmatpush1.msra.mxu0 0.0
    %782 = vmatprep.subr.mxu0 0.0
    %783 = vmatpush1.msra.mxu0 0.0
    %784 = vmatprep.subr.mxu0 0.0
    %785 = vmatpush1.msra.mxu0 0.0
    %786 = vmatprep.subr.mxu0 0.0
    %787 = vmatpush1.msra.mxu0 0.0
    %788 = vmatprep.subr.mxu0 0.0
    %789 = vmatpush1.msra.mxu0 0.0
    %790 = vmatprep.subr.mxu0 0.0
    %791 = vmatpush1.msra.mxu0 0.0
    %792 = vmatprep.subr.mxu0 0.0
    %793 = vmatpush1.msra.mxu0 0.0
    %794 = vmatprep.subr.mxu0 0.0
    %795 = vmatpush1.msra.mxu0 0.0
    %796 = vmatprep.subr.mxu0 0.0
    %797 = vmatpush1.msra.mxu0 0.0
    %798 = vmatprep.subr.mxu0 0.0
    %799 = vmatpush1.msra.mxu0 0.0
    %800 = vmatprep.subr.mxu0 0.0
    %801 = vmatpush1.msra.mxu0 0.0
    %802 = vmatprep.subr.mxu0 0.0
    %803 = vmatpush1.msra.mxu0 0.0
    %804 = vmatprep.subr.mxu0 0.0
    %805 = vmatpush1.msra.mxu0 0.0
    %806 = vmatprep.mubr.f32.mxu0 0.0
    %807 = vmatmul.mubr.f32.gmra.mrb[0].mxu0 %v734
    %v808 = vpop.f32.mrb[0].mxu0
    %v809 = vadd.f32 0.0, %v808
    %v810 = vpop.f32.mrb[0].mxu0
    %811 = vmatprep.mubr.f32.mxu0 0.0
    %812 = vmatmul.mubr.f32.gmra.mrb[0].mxu0 %v737
    %v813 = vpop.f32.mrb[0].mxu0
    %v814 = vadd.f32 0.0, %v813
    %v815 = vpop.f32.mrb[0].mxu0
    %816 = vmatprep.mubr.f32.mxu0 0.0
    %817 = vmatmul.mubr.f32.gmra.mrb[0].mxu0 %v740
    %v818 = vpop.f32.mrb[0].mxu0
    %v819 = vadd.f32 0.0, %v818
    %v820 = vpop.f32.mrb[0].mxu0
    %821 = vdwg.mxu0
    %v823 = vrot.slane %v809, 7
    %824 = vrot.lane.b32.xlu0 %v823, 96
    %v825 = vpop.permute.xlu0 %824
    %v827 = vadd.f32 %v809, %v825
    %v828 = vadd.f32 %v814, %v825
    %829 = vrot.lane.b32.xlu0 %v823, 112
    %v830 = vpop.permute.xlu0 %829
    %v833 = vrot.slane %v827, 7
    %v835 = vrot.slane %v809, 6
    %836 = vrot.lane.b32.xlu0 %v835, 112
    %v837 = vpop.permute.xlu0 %836
    %v839 = vrot.slane %v827, 6
    %v841 = vrot.slane %v809, 5
    %842 = vrot.lane.b32.xlu0 %v841, 112
    %v843 = vpop.permute.xlu0 %842
    %v845 = vrot.slane %v827, 5
    %v847 = vrot.slane %v809, 4
    %848 = vrot.lane.b32.xlu0 %v847, 112
    %v849 = vpop.permute.xlu0 %848
    %v851 = vrot.slane %v827, 4
    %v853 = vrot.slane %v809, 3
    %854 = vrot.lane.b32.xlu0 %v853, 112
    %v855 = vpop.permute.xlu0 %854
    %v857 = vrot.slane %v827, 3
    %v859 = vrot.slane %v809, 2
    %860 = vrot.lane.b32.xlu0 %v859, 112
    %v861 = vpop.permute.xlu0 %860
    %v863 = vrot.slane %v827, 2
    %v865 = vrot.slane %v809, 1
    %866 = vrot.lane.b32.xlu0 %v865, 112
    %v867 = vpop.permute.xlu0 %866
    %v869 = vrot.slane %v827, 1
    %871 = vrot.lane.b32.xlu0 %v809, 112
    %v872 = vpop.permute.xlu0 %871
    %v874 = vsel %vm118, %v809, %v830
    %v875 = vsel %vm244, %v874, %v833
    %v876 = vsel %vm246, %v875, %v837
    %v877 = vsel %vm281, %v876, %v839
    %v878 = vsel %vm684, %v877, %v843
    %v879 = vsel %vm686, %v878, %v845
    %v880 = vsel %vm688, %v879, %v849
    %v881 = vsel %vm118, %v851, %v855
    %v882 = vsel %vm244, %v881, %v857
    %v883 = vsel %vm246, %v882, %v861
    %v884 = vsel %vm281, %v883, %v863
    %v885 = vsel %vm684, %v884, %v867
    %v886 = vsel %vm686, %v885, %v869
    %v887 = vsel %vm688, %v886, %v872
    %v889 = vrot.slane %v814, 7
    %890 = vrot.lane.b32.xlu0 %v889, 112
    %v891 = vpop.permute.xlu0 %890
    %v893 = vrot.slane %v814, 6
    %894 = vrot.lane.b32.xlu0 %v893, 96
    %v895 = vpop.permute.xlu0 %894
    %v897 = vsel %vm118, %v828, %v891
    %v898 = vsel %vm244, %v897, %v895
    %899 = vrot.lane.b32.xlu0 %v889, 96
    %v900 = vpop.permute.xlu0 %899
    %v902 = vadd.f32 %v814, %v900
    %v903 = vadd.f32 %v819, %v900
    %v905 = vrot.slane %v819, 7
    %906 = vrot.lane.b32.xlu0 %v905, 96
    %v907 = vpop.permute.xlu0 %906
    %v909 = vadd.f32 %v819, %v907
    %v910 = vrot.slane %v814, 1
    %912 = vrot.lane.b32.xlu0 %v814, 112
    %v913 = vpop.permute.xlu0 %912
    %v916 = vrot.slane %v902, 7
    %918 = vrot.lane.b32.xlu0 %v893, 112
    %v919 = vpop.permute.xlu0 %918
    %v921 = vrot.slane %v902, 6
    %v923 = vrot.slane %v814, 5
    %924 = vrot.lane.b32.xlu0 %v923, 112
    %v925 = vpop.permute.xlu0 %924
    %v927 = vrot.slane %v902, 5
    %v929 = vrot.slane %v814, 4
    %930 = vrot.lane.b32.xlu0 %v929, 112
    %v931 = vpop.permute.xlu0 %930
    %v933 = vrot.slane %v902, 4
    %v935 = vrot.slane %v814, 3
    %936 = vrot.lane.b32.xlu0 %v935, 112
    %v937 = vpop.permute.xlu0 %936
    %v939 = vrot.slane %v902, 3
    %v941 = vrot.slane %v814, 2
    %942 = vrot.lane.b32.xlu0 %v941, 112
    %v943 = vpop.permute.xlu0 %942
    %v946 = vrot.slane %v903, 2
    %v948 = vrot.slane %v819, 1
    %949 = vrot.lane.b32.xlu0 %v948, 112
    %v950 = vpop.permute.xlu0 %949
    %v952 = vsel %vm118, %v910, %v913
    %v953 = vsel %vm244, %v952, %v902
    %v954 = vsel %vm246, %v953, %v891
    %v955 = vsel %vm281, %v954, %v916
    %v956 = vsel %vm684, %v955, %v919
    %v957 = vsel %vm686, %v956, %v921
    %v958 = vsel %vm688, %v957, %v925
    %v959 = vsel %vm118, %v927, %v931
    %v960 = vsel %vm244, %v959, %v933
    %v961 = vsel %vm246, %v960, %v937
    %v962 = vsel %vm281, %v961, %v939
    %v963 = vsel %vm684, %v962, %v943
    %v964 = vsel %vm686, %v963, %v946
    %v965 = vsel %vm688, %v964, %v950
    %v967 = vrot.slane %v909, 1
    %969 = vrot.lane.b32.xlu0 %v819, 112
    %v970 = vpop.permute.xlu0 %969
    %v972 = vsel %vm118, %v967, %v970
    %v973 = vsel %vm244, %v972, %v907
    %v977 = vrot.slane %v958, 5
    %v978 = vrot.slane %v965, 5
    %v979 = vsel %vm246, %v977, %v978
    %v980 = vrot.slane %v973, 5
    %v981 = vsel %vm246, %v978, %v980
    %v985 = vsel %vm246, %v898, %v977
    %986 = vrot.lane.b32.xlu0 %v50, 90
    %v987 = vpop.permute.xlu0 %986
    %s988 = vtos %v987
    %v989 = vstv %s988
    %v991 = vadd.f32 %v880, %v989
    %v992 = vadd.f32 %v887, %v989
    %v993 = vadd.f32 %v985, %v989
    %v994 = vadd.f32 %v979, %v989
    %v995 = vadd.f32 %v981, %v989
    %v997 = vsel %vm78, %v991, 0
    %v1000 = vsel %vm78, %v992, 0
    %v1003 = vsel %vm78, %v993, 0
    %v1006 = vsel %vm78, %v994, 0
    %v1009 = vsel %vm78, %v995, 0
    %1011 = vmatprep.subr.mxu0 0.0
    %1012 = vmatpush1.msra.mxu0 %v48
    %1013 = vmatprep.subr.mxu0 0.0
    %1014 = vmatpush1.msra.mxu0 %v49
    %1015 = vmatprep.subr.mxu0 0.0
    %1016 = vmatpush1.msra.mxu0 0.0
    %1017 = vmatprep.subr.mxu0 0.0
    %1018 = vmatpush1.msra.mxu0 0.0
    %1019 = vmatprep.subr.mxu0 0.0
    %1020 = vmatpush1.msra.mxu0 0.0
    %1021 = vmatprep.subr.mxu0 0.0
    %1022 = vmatpush1.msra.mxu0 0.0
    %1023 = vmatprep.subr.mxu0 0.0
    %1024 = vmatpush1.msra.mxu0 0.0
    %1025 = vmatprep.subr.mxu0 0.0
    %1026 = vmatpush1.msra.mxu0 0.0
    %1027 = vmatprep.subr.mxu0 0.0
    %1028 = vmatpush1.msra.mxu0 0.0
    %1029 = vmatprep.subr.mxu0 0.0
    %1030 = vmatpush1.msra.mxu0 0.0
    %1031 = vmatprep.subr.mxu0 0.0
    %1032 = vmatpush1.msra.mxu0 0.0
    %1033 = vmatprep.subr.mxu0 0.0
    %1034 = vmatpush1.msra.mxu0 0.0
    %1035 = vmatprep.subr.mxu0 0.0
    %1036 = vmatpush1.msra.mxu0 0.0
    %1037 = vmatprep.subr.mxu0 0.0
    %1038 = vmatpush1.msra.mxu0 0.0
    %1039 = vmatprep.subr.mxu0 0.0
    %1040 = vmatpush1.msra.mxu0 0.0
    %1041 = vmatprep.subr.mxu0 0.0
    %1042 = vmatpush1.msra.mxu0 0.0
    %1043 = vmatprep.subr.mxu0 0.0
    %1044 = vmatpush1.msra.mxu0 0.0
    %1045 = vmatprep.subr.mxu0 0.0
    %1046 = vmatpush1.msra.mxu0 0.0
    %1047 = vmatprep.subr.mxu0 0.0
    %1048 = vmatpush1.msra.mxu0 0.0
    %1049 = vmatprep.subr.mxu0 0.0
    %1050 = vmatpush1.msra.mxu0 0.0
    %1051 = vmatprep.subr.mxu0 0.0
    %1052 = vmatpush1.msra.mxu0 0.0
    %1053 = vmatprep.subr.mxu0 0.0
    %1054 = vmatpush1.msra.mxu0 0.0
    %1055 = vmatprep.subr.mxu0 0.0
    %1056 = vmatpush1.msra.mxu0 0.0
    %1057 = vmatprep.subr.mxu0 0.0
    %1058 = vmatpush1.msra.mxu0 0.0
    %1059 = vmatprep.subr.mxu0 0.0
    %1060 = vmatpush1.msra.mxu0 0.0
    %1061 = vmatprep.subr.mxu0 0.0
    %1062 = vmatpush1.msra.mxu0 0.0
    %1063 = vmatprep.subr.mxu0 0.0
    %1064 = vmatpush1.msra.mxu0 0.0
    %1065 = vmatprep.subr.mxu0 0.0
    %1066 = vmatpush1.msra.mxu0 0.0
    %1067 = vmatprep.subr.mxu0 0.0
    %1068 = vmatpush1.msra.mxu0 0.0
    %1069 = vmatprep.subr.mxu0 0.0
    %1070 = vmatpush1.msra.mxu0 0.0
    %1071 = vmatprep.subr.mxu0 0.0
    %1072 = vmatpush1.msra.mxu0 0.0
    %1073 = vmatprep.subr.mxu0 0.0
    %1074 = vmatpush1.msra.mxu0 0.0
    %1075 = vmatprep.mubr.f32.mxu0 0.0
    %1076 = vmatmul.mubr.f32.gmra.mrb[0].mxu0 %v997
    %v1077 = vpop.f32.mrb[0].mxu0
    %v1078 = vadd.f32 0.0, %v1077
    %v1079 = vpop.f32.mrb[0].mxu0
    %1080 = vmatprep.mubr.f32.mxu0 0.0
    %1081 = vmatmul.mubr.f32.gmra.mrb[0].mxu0 %v1000
    %v1082 = vpop.f32.mrb[0].mxu0
    %v1083 = vadd.f32 0.0, %v1082
    %v1084 = vpop.f32.mrb[0].mxu0
    %1085 = vmatprep.mubr.f32.mxu0 0.0
    %1086 = vmatmul.mubr.f32.gmra.mrb[0].mxu0 %v1003
    %v1087 = vpop.f32.mrb[0].mxu0
    %v1088 = vadd.f32 0.0, %v1087
    %v1089 = vpop.f32.mrb[0].mxu0
    %1090 = vmatprep.mubr.f32.mxu0 0.0
    %1091 = vmatmul.mubr.f32.gmra.mrb[0].mxu0 %v1006
    %v1092 = vpop.f32.mrb[0].mxu0
    %v1093 = vadd.f32 0.0, %v1092
    %v1094 = vpop.f32.mrb[0].mxu0
    %1095 = vmatprep.mubr.f32.mxu0 0.0
    %1096 = vmatmul.mubr.f32.gmra.mrb[0].mxu0 %v1009
    %v1097 = vpop.f32.mrb[0].mxu0
    %v1098 = vadd.f32 0.0, %v1097
    %v1099 = vpop.f32.mrb[0].mxu0
    %1100 = vdwg.mxu0
    %1101 = vst [vmem:[#allocation5] sm:$0xff] %v1078
    %1102 = vst [vmem:[#allocation5 + $0x8] sm:$0xff] %v1083
    %1103 = vst [vmem:[#allocation5 + $0x10] sm:$0xff] %v1088
    %1104 = vst [vmem:[#allocation5 + $0x18] sm:$0xff] %v1093
    %1105 = vst [vmem:[#allocation5 + $0x20] sm:$0x3f] %v1098
    // Predicated region
    $region14: #{tpu_custom_call.1} parent=1 // pred_check
      _
    $region15: #{tpu_custom_call.1} parent=1 // pred_check_branch
      %1107 = sbr.rel (0) target = $region17
    $region16: #{tpu_custom_call.1} parent=1 // pred_region
      %s1109 = ssub.s32 640, 640
      %1110 = vsyncadd [#allocation4], %s1109
      %s1111 = sshll.u32 [#allocation5], 4
      %s1112 = int_to_ptr.vmem [resolvable:$true] %s1111
      %1117 = dma.vmem_to_hbm [thread:$0]  %s1112, 640, %s2, [#allocation4], 128, 128, 8
    $region17: #{tpu_custom_call.1} parent=1 // pred_fallthru
      _
    // Predicated region
    $region18: #{tpu_custom_call.1} parent=1 // pred_check
      _
    $region19: #{tpu_custom_call.1} parent=1 // pred_check_branch
      %1119 = sbr.rel (0) target = $region21
    $region20: #{tpu_custom_call.1} parent=1 // pred_region
      %1120 = dma.done [#allocation4], 640
    $region21: #{tpu_custom_call.1} parent=1 // pred_fallthru
      _
    %1121 = vsyncpa [#allocation3], 1
    %1122 = vsyncpa [#allocation4], 1

</llo_original>
